<compile_context>
chip_gen: v5e
topology: v5e:2x2
jax: 0.10.0
libtpu: 0.0.40
codegen_flags: <defaults>
</compile_context>

<pallas_src>
import functools

import jax
import jax.numpy as jnp
from jax.experimental import pallas as pl
from jax.experimental.pallas import tpu as pltpu


def _round_up(x, m):
    return (x + m - 1) // m * m


def _zero_map(nd):
    return lambda i: (0,) * nd


def _fused_rnn_kernel(*refs, T, L, nonlinearity):
    """All layers + all time steps + final fc in one kernel invocation.

    refs (inputs, then output, then scratch):
      x_ref:    (T, Bp, F_in)  time-major, zero-padded input
      wih0_ref: (F_in, F)      layer-0 input->hidden weight (pre-transposed)
      wihr_ref: (L-1, F, F)    layers>=1 input->hidden weights (only if L > 1)
      whh_ref:  (L, F, F)      hidden->hidden weights (pre-transposed)
      b_ref:    (L, 1, F)      folded bias b_ih + b_hh (always f32)
      fcw_ref:  (F, Op)        final linear weight (pre-transposed)
      fcb_ref:  (1, Op)        final linear bias (f32)
      out_ref:  (Bp, Op)       fused fc output (f32, lane-dense)
      buf_ref:  (T, Bp, F)     VMEM: projection buffer / hidden sequence (in place)
    """
    if L > 1:
        (x_ref, wih0_ref, wihr_ref, whh_ref, b_ref, fcw_ref, fcb_ref,
         out_ref, buf_ref) = refs
    else:
        (x_ref, wih0_ref, whh_ref, b_ref, fcw_ref, fcb_ref,
         out_ref, buf_ref) = refs
        wihr_ref = None

    _, Bp, F = buf_ref.shape
    act = jnp.tanh if nonlinearity == "tanh" else (lambda v: jnp.maximum(v, 0.0))

    h = jnp.zeros((Bp, F), jnp.float32)
    for layer in range(L):
        # ---- Hoisted time-independent projection: one big MXU matmul ----
        if layer == 0:
            lhs = x_ref[...].reshape(T * Bp, x_ref.shape[-1])
            w_in = wih0_ref[...]
        else:
            lhs = buf_ref[...].reshape(T * Bp, F)   # previous layer's h sequence
            w_in = wihr_ref[layer - 1]
        buf_ref[...] = (jnp.dot(lhs, w_in, preferred_element_type=jnp.float32)
                        + b_ref[layer]).reshape(T, Bp, F).astype(buf_ref.dtype)

        last = (layer == L - 1)

        def step(t, h, *, last=last, layer=layer):
            # Serial path per step: one (Bp,F)x(F,F) MXU matmul + add + act.
            pre = buf_ref[t] + jnp.dot(h.astype(whh_ref.dtype), whh_ref[layer],
                                       preferred_element_type=jnp.float32)
            h_new = act(pre)                        # f32 on the critical path
            if not last:
                buf_ref[t] = h_new.astype(buf_ref.dtype)   # feeds next layer
            return h_new

        # h0 = 0 (PyTorch default); h carried in registers, bounded unroll.
        h = jax.lax.fori_loop(0, T, step, jnp.zeros((Bp, F), jnp.float32),
                              unroll=min(T, 8))

    # ---- Fused final Linear on h_T of the last layer (lane-dense output) ----
    out_ref[...] = (jnp.dot(h.astype(fcw_ref.dtype), fcw_ref[...],
                            preferred_element_type=jnp.float32)
                    + fcb_ref[...]).astype(out_ref.dtype)


def rnn_forward(x, params, nonlinearity="tanh", mxu_dtype=jnp.float32):
    """x: (B, T, input_size) batch-first (like the PyTorch module) -> (B, output_size).

    mxu_dtype: dtype of the MXU operands (weights, x, sequence buffer).
    bf16 halves DMA/VMEM bytes; accumulation, h and activations stay f32.
    """
    B, T, I = x.shape
    layers = params["layers"]
    L = len(layers)
    H = layers[0]["w_hh"].shape[0]
    O = params["fc_w"].shape[1]

    F = _round_up(H, 128)          # lane width of hidden / inter-layer activations
    F_in = _round_up(I, 128)       # lane width of the raw input only
    Bp = _round_up(B, 8)           # sublane-aligned batch (don't shrink it; fill MXU rows)
    Op = _round_up(O, 128)         # lane-dense fc output

    f32 = jnp.float32
    # ---- Pack / zero-pad weights once (zero padding keeps the math exact) ----
    wih0 = jnp.zeros((F_in, F), f32).at[:I, :H].set(layers[0]["w_ih"]).astype(mxu_dtype)
    whh = jnp.zeros((L, F, F), f32)
    bb = jnp.zeros((L, 1, F), f32)
    for l, lp in enumerate(layers):
        whh = whh.at[l, :H, :H].set(lp["w_hh"])
        bb = bb.at[l, :, :H].set(lp["b_ih"] + lp["b_hh"])          # folded bias
    whh = whh.astype(mxu_dtype)
    if L > 1:
        wihr = jnp.zeros((L - 1, F, F), f32)
        for l in range(1, L):
            wihr = wihr.at[l - 1, :H, :H].set(layers[l]["w_ih"])
        wihr = wihr.astype(mxu_dtype)
    fcw = jnp.zeros((F, Op), f32).at[:H, :O].set(params["fc_w"]).astype(mxu_dtype)
    fcb = jnp.zeros((1, Op), f32).at[:, :O].set(params["fc_b"])

    # Time-major + zero-pad the input once (tiny one-time XLA op at these sizes).
    x_p = jnp.zeros((T, Bp, F_in), f32).at[:, :B, :I].set(
        jnp.transpose(x, (1, 0, 2))).astype(mxu_dtype)

    inputs = [x_p, wih0] + ([wihr] if L > 1 else []) + [whh, bb, fcw, fcb]
    in_specs = [pl.BlockSpec(tuple(a.shape), _zero_map(a.ndim)) for a in inputs]

    # Explicit VMEM budget: inputs/outputs are double-buffered by the default
    # BlockSpec pipeline (x2), plus the single (T,Bp,F) scratch buffer.
    resident = 2 * sum(int(a.size) * a.dtype.itemsize for a in inputs)
    resident += 2 * Bp * Op * 4
    resident += T * Bp * F * jnp.dtype(mxu_dtype).itemsize
    vmem_limit = int(min(max(resident + (4 << 20), 16 << 20), 100 << 20))

    kernel = functools.partial(_fused_rnn_kernel, T=T, L=L,
                               nonlinearity=nonlinearity)
    out_p = pl.pallas_call(
        kernel,
        out_shape=jax.ShapeDtypeStruct((Bp, Op), jnp.float32),
        grid_spec=pltpu.PrefetchScalarGridSpec(
            num_scalar_prefetch=0,
            grid=(1,),
            in_specs=in_specs,
            out_specs=pl.BlockSpec((Bp, Op), lambda i: (0, 0)),
            scratch_shapes=[
                pltpu.VMEM((T, Bp, F), mxu_dtype),   # projection / hidden sequence
            ],
        ),
        compiler_params=pltpu.CompilerParams(
            dimension_semantics=("arbitrary",),      # single sequential invocation
            vmem_limit_bytes=vmem_limit),
    )(*inputs)

    return out_p[:B, :O]


def init_params(key, input_size, hidden_size, num_layers, output_size):
    """Deterministic synthetic init (matches PyTorch U(-1/sqrt(H), 1/sqrt(H)))."""
    params = {"layers": []}
    k = 1.0 / jnp.sqrt(jnp.float32(hidden_size))
    for layer in range(num_layers):
        in_f = input_size if layer == 0 else hidden_size
        key, k1, k2, k3, k4 = jax.random.split(key, 5)
        params["layers"].append({
            # stored as (in_features, out_features) == W^T of PyTorch layout
            "w_ih": jax.random.uniform(k1, (in_f, hidden_size), jnp.float32, -k, k),
            "w_hh": jax.random.uniform(k2, (hidden_size, hidden_size), jnp.float32, -k, k),
            "b_ih": jax.random.uniform(k3, (1, hidden_size), jnp.float32, -k, k),
            "b_hh": jax.random.uniform(k4, (1, hidden_size), jnp.float32, -k, k),
        })
    key, k1, k2 = jax.random.split(key, 3)
    params["fc_w"] = jax.random.uniform(k1, (hidden_size, output_size),
                                        jnp.float32, -k, k)
    params["fc_b"] = jax.random.uniform(k2, (1, output_size), jnp.float32, -k, k)
    return params


def _reference_forward(x, params, nonlinearity="tanh"):
    """Pure-JAX reference of the PyTorch module forward (eval mode)."""
    act = jnp.tanh if nonlinearity == "tanh" else (lambda v: jnp.maximum(v, 0.0))
    B = x.shape[0]
    h_seq = x
    for lp in params["layers"]:
        h = jnp.zeros((B, lp["w_hh"].shape[0]), jnp.float32)
        outs = []
        for t in range(h_seq.shape[1]):
            h = act(h_seq[:, t, :] @ lp["w_ih"] + lp["b_ih"]
                    + h @ lp["w_hh"] + lp["b_hh"])
            outs.append(h)
        h_seq = jnp.stack(outs, axis=1)
    return h_seq[:, -1, :] @ params["fc_w"] + params["fc_b"]


if __name__ == "__main__":
    key = jax.random.PRNGKey(0)

    # 1) Base config (PyTorch module defaults): f32, 2 layers, tanh. Strict check.
    input_size, hidden_size, num_layers = 16, 32, 2
    nonlinearity, output_size = "tanh", 50
    batch, seq = 2, 8
    key, kx, kp = jax.random.split(key, 3)
    x = jax.random.normal(kx, (batch, seq, input_size), jnp.float32)
    params = init_params(kp, input_size, hidden_size, num_layers, output_size)

    out = rnn_forward(x, params, nonlinearity)
    jax.block_until_ready(out)
    assert out.shape == (batch, output_size), out.shape
    ref = _reference_forward(x, params, nonlinearity)
    assert jnp.allclose(out, ref, rtol=1e-4, atol=1e-4), \
        float(jnp.max(jnp.abs(out - ref)))

    # 2) Same config with bf16 MXU operands (f32 accumulation / activations);
    #    looser tolerance accounts for bf16 weight/activation quantization.
    out_bf16 = rnn_forward(x, params, nonlinearity, mxu_dtype=jnp.bfloat16)
    jax.block_until_ready(out_bf16)
    assert jnp.allclose(out_bf16, ref, rtol=5e-2, atol=5e-2), \
        float(jnp.max(jnp.abs(out_bf16 - ref)))

    # 3) Code-path exercise: single layer, relu, input lane width != hidden lane
    #    width (F_in=256, F=128).  Modest tolerance (fp reassociation / MXU).
    input_size2, hidden_size2, num_layers2 = 200, 32, 1
    key, kx2, kp2 = jax.random.split(key, 3)
    x2 = jax.random.normal(kx2, (batch, seq, input_size2), jnp.float32)
    params2 = init_params(kp2, input_size2, hidden_size2, num_layers2, output_size)
    out2 = rnn_forward(x2, params2, "relu")
    jax.block_until_ready(out2)
    assert out2.shape == (batch, output_size), out2.shape
    ref2 = _reference_forward(x2, params2, "relu")
    assert jnp.allclose(out2, ref2, rtol=1e-2, atol=1e-2), \
        float(jnp.max(jnp.abs(out2 - ref2)))

    print("KERNEL_OK")
</pallas_src>

<mosaic_0001>
module attributes {stable_mosaic.version = 11 : i64} {
  func.func @_fused_rnn_kernel(%arg0: i32, %arg1: memref<8x8x128xf32, #tpu.memory_space<vmem>>, %arg2: memref<128x128xf32, #tpu.memory_space<vmem>>, %arg3: memref<1x128x128xf32, #tpu.memory_space<vmem>>, %arg4: memref<2x128x128xf32, #tpu.memory_space<vmem>>, %arg5: memref<2x1x128xf32, #tpu.memory_space<vmem>>, %arg6: memref<128x128xf32, #tpu.memory_space<vmem>>, %arg7: memref<1x128xf32, #tpu.memory_space<vmem>>, %arg8: memref<8x128xf32, #tpu.memory_space<vmem>>, %arg9: memref<8x8x128xf32, #tpu.memory_space<vmem>>) attributes {dimension_semantics = [#tpu.dimension_semantics<arbitrary>], iteration_bounds = array<i64: 1>, scalar_prefetch = 0 : i64, scratch_operands = 1 : i64, tpu.core_type = #tpu.core_type<tc>, window_params = [{pipeline_mode = #tpu.pipeline_mode<synchronous>, transform_indices = @transform_0, window_bounds = array<i64: 8, 8, 128>}, {pipeline_mode = #tpu.pipeline_mode<synchronous>, transform_indices = @transform_1, window_bounds = array<i64: 128, 128>}, {pipeline_mode = #tpu.pipeline_mode<synchronous>, transform_indices = @transform_2, window_bounds = array<i64: 1, 128, 128>}, {pipeline_mode = #tpu.pipeline_mode<synchronous>, transform_indices = @transform_3, window_bounds = array<i64: 2, 128, 128>}, {pipeline_mode = #tpu.pipeline_mode<synchronous>, transform_indices = @transform_4, window_bounds = array<i64: 2, 1, 128>}, {pipeline_mode = #tpu.pipeline_mode<synchronous>, transform_indices = @transform_5, window_bounds = array<i64: 128, 128>}, {pipeline_mode = #tpu.pipeline_mode<synchronous>, transform_indices = @transform_6, window_bounds = array<i64: 1, 128>}, {pipeline_mode = #tpu.pipeline_mode<synchronous>, transform_indices = @transform_7, window_bounds = array<i64: 8, 128>}]} {
    %c0 = arith.constant 0 : index
    %c0_0 = arith.constant 0 : index
    %c0_1 = arith.constant 0 : index
    %0 = vector.load %arg1[%c0, %c0_0, %c0_1] : memref<8x8x128xf32, #tpu.memory_space<vmem>>, vector<8x8x128xf32>
    %1 = vector.shape_cast %0 : vector<8x8x128xf32> to vector<64x128xf32>
    %c0_2 = arith.constant 0 : index
    %c0_3 = arith.constant 0 : index
    %2 = vector.load %arg2[%c0_2, %c0_3] : memref<128x128xf32, #tpu.memory_space<vmem>>, vector<128x128xf32>
    %cst = arith.constant dense<0.000000e+00> : vector<64x128xf32>
    %3 = tpu.matmul %1, %2, %cst {dimension_numbers = #tpu.dot_dimension_numbers<[1], [0], [0], [1], [0, 0, 1, 1], [], []>} : vector<64x128xf32>, vector<128x128xf32>, vector<64x128xf32> -> vector<64x128xf32>
    %c0_4 = arith.constant 0 : index
    %c0_5 = arith.constant 0 : index
    %c0_6 = arith.constant 0 : index
    %4 = vector.load %arg5[%c0_4, %c0_5, %c0_6] : memref<2x1x128xf32, #tpu.memory_space<vmem>>, vector<1x1x128xf32>
    %5 = vector.shape_cast %4 : vector<1x1x128xf32> to vector<1x128xf32>
    %6 = vector.broadcast %5 : vector<1x128xf32> to vector<64x128xf32>
    %7 = arith.addf %3, %6 : vector<64x128xf32>
    %8 = vector.shape_cast %7 : vector<64x128xf32> to vector<8x8x128xf32>
    %c0_7 = arith.constant 0 : index
    %c0_8 = arith.constant 0 : index
    %c0_9 = arith.constant 0 : index
    %9 = vector.load %arg9[%c0_7, %c0_8, %c0_9] : memref<8x8x128xf32, #tpu.memory_space<vmem>>, vector<8x8x128xf32>
    tpu.vector_store %arg9[%c0_7, %c0_8, %c0_9], %8 {strides = array<i32>} : memref<8x8x128xf32, #tpu.memory_space<vmem>>, vector<8x8x128xf32>,
    %cst_10 = arith.constant 0.000000e+00 : f32
    %10 = vector.broadcast %cst_10 : f32 to vector<8x128xf32>
    %c0_i32 = arith.constant 0 : i32
    %11 = arith.index_cast %c0_i32 : i32 to index
    %c0_11 = arith.constant 0 : index
    %c0_12 = arith.constant 0 : index
    %12 = vector.load %arg9[%11, %c0_11, %c0_12] : memref<8x8x128xf32, #tpu.memory_space<vmem>>, vector<1x8x128xf32>
    %13 = vector.shape_cast %12 : vector<1x8x128xf32> to vector<8x128xf32>
    %c0_13 = arith.constant 0 : index
    %c0_14 = arith.constant 0 : index
    %c0_15 = arith.constant 0 : index
    %14 = vector.load %arg4[%c0_13, %c0_14, %c0_15] : memref<2x128x128xf32, #tpu.memory_space<vmem>>, vector<1x128x128xf32>
    %15 = vector.shape_cast %14 : vector<1x128x128xf32> to vector<128x128xf32>
    %cst_16 = arith.constant dense<0.000000e+00> : vector<8x128xf32>
    %16 = tpu.matmul %10, %15, %cst_16 {dimension_numbers = #tpu.dot_dimension_numbers<[1], [0], [0], [1], [0, 0, 1, 1], [], []>} : vector<8x128xf32>, vector<128x128xf32>, vector<8x128xf32> -> vector<8x128xf32>
    %17 = arith.addf %13, %16 : vector<8x128xf32>
    %18 = math.tanh %17 : vector<8x128xf32>
    %19 = arith.index_cast %c0_i32 : i32 to index
    %c0_17 = arith.constant 0 : index
    %c0_18 = arith.constant 0 : index
    %20 = vector.load %arg9[%19, %c0_17, %c0_18] : memref<8x8x128xf32, #tpu.memory_space<vmem>>, vector<1x8x128xf32>
    %21 = vector.shape_cast %20 : vector<1x8x128xf32> to vector<8x128xf32>
    %22 = vector.shape_cast %18 : vector<8x128xf32> to vector<1x8x128xf32>
    tpu.vector_store %arg9[%19, %c0_17, %c0_18], %22 {strides = array<i32>} : memref<8x8x128xf32, #tpu.memory_space<vmem>>, vector<1x8x128xf32>,
    %c1_i32 = arith.constant 1 : i32
    %23 = arith.index_cast %c1_i32 : i32 to index
    %c0_19 = arith.constant 0 : index
    %c0_20 = arith.constant 0 : index
    %24 = vector.load %arg9[%23, %c0_19, %c0_20] : memref<8x8x128xf32, #tpu.memory_space<vmem>>, vector<1x8x128xf32>
    %25 = vector.shape_cast %24 : vector<1x8x128xf32> to vector<8x128xf32>
    %c0_21 = arith.constant 0 : index
    %c0_22 = arith.constant 0 : index
    %c0_23 = arith.constant 0 : index
    %26 = vector.load %arg4[%c0_21, %c0_22, %c0_23] : memref<2x128x128xf32, #tpu.memory_space<vmem>>, vector<1x128x128xf32>
    %27 = vector.shape_cast %26 : vector<1x128x128xf32> to vector<128x128xf32>
    %cst_24 = arith.constant dense<0.000000e+00> : vector<8x128xf32>
    %28 = tpu.matmul %18, %27, %cst_24 {dimension_numbers = #tpu.dot_dimension_numbers<[1], [0], [0], [1], [0, 0, 1, 1], [], []>} : vector<8x128xf32>, vector<128x128xf32>, vector<8x128xf32> -> vector<8x128xf32>
    %29 = arith.addf %25, %28 : vector<8x128xf32>
    %30 = math.tanh %29 : vector<8x128xf32>
    %31 = arith.index_cast %c1_i32 : i32 to index
    %c0_25 = arith.constant 0 : index
    %c0_26 = arith.constant 0 : index
    %32 = vector.load %arg9[%31, %c0_25, %c0_26] : memref<8x8x128xf32, #tpu.memory_space<vmem>>, vector<1x8x128xf32>
    %33 = vector.shape_cast %32 : vector<1x8x128xf32> to vector<8x128xf32>
    %34 = vector.shape_cast %30 : vector<8x128xf32> to vector<1x8x128xf32>
    tpu.vector_store %arg9[%31, %c0_25, %c0_26], %34 {strides = array<i32>} : memref<8x8x128xf32, #tpu.memory_space<vmem>>, vector<1x8x128xf32>,
    %c2_i32 = arith.constant 2 : i32
    %35 = arith.index_cast %c2_i32 : i32 to index
    %c0_27 = arith.constant 0 : index
    %c0_28 = arith.constant 0 : index
    %36 = vector.load %arg9[%35, %c0_27, %c0_28] : memref<8x8x128xf32, #tpu.memory_space<vmem>>, vector<1x8x128xf32>
    %37 = vector.shape_cast %36 : vector<1x8x128xf32> to vector<8x128xf32>
    %c0_29 = arith.constant 0 : index
    %c0_30 = arith.constant 0 : index
    %c0_31 = arith.constant 0 : index
    %38 = vector.load %arg4[%c0_29, %c0_30, %c0_31] : memref<2x128x128xf32, #tpu.memory_space<vmem>>, vector<1x128x128xf32>
    %39 = vector.shape_cast %38 : vector<1x128x128xf32> to vector<128x128xf32>
    %cst_32 = arith.constant dense<0.000000e+00> : vector<8x128xf32>
    %40 = tpu.matmul %30, %39, %cst_32 {dimension_numbers = #tpu.dot_dimension_numbers<[1], [0], [0], [1], [0, 0, 1, 1], [], []>} : vector<8x128xf32>, vector<128x128xf32>, vector<8x128xf32> -> vector<8x128xf32>
    %41 = arith.addf %37, %40 : vector<8x128xf32>
    %42 = math.tanh %41 : vector<8x128xf32>
    %43 = arith.index_cast %c2_i32 : i32 to index
    %c0_33 = arith.constant 0 : index
    %c0_34 = arith.constant 0 : index
    %44 = vector.load %arg9[%43, %c0_33, %c0_34] : memref<8x8x128xf32, #tpu.memory_space<vmem>>, vector<1x8x128xf32>
    %45 = vector.shape_cast %44 : vector<1x8x128xf32> to vector<8x128xf32>
    %46 = vector.shape_cast %42 : vector<8x128xf32> to vector<1x8x128xf32>
    tpu.vector_store %arg9[%43, %c0_33, %c0_34], %46 {strides = array<i32>} : memref<8x8x128xf32, #tpu.memory_space<vmem>>, vector<1x8x128xf32>,
    %c3_i32 = arith.constant 3 : i32
    %47 = arith.index_cast %c3_i32 : i32 to index
    %c0_35 = arith.constant 0 : index
    %c0_36 = arith.constant 0 : index
    %48 = vector.load %arg9[%47, %c0_35, %c0_36] : memref<8x8x128xf32, #tpu.memory_space<vmem>>, vector<1x8x128xf32>
    %49 = vector.shape_cast %48 : vector<1x8x128xf32> to vector<8x128xf32>
    %c0_37 = arith.constant 0 : index
    %c0_38 = arith.constant 0 : index
    %c0_39 = arith.constant 0 : index
    %50 = vector.load %arg4[%c0_37, %c0_38, %c0_39] : memref<2x128x128xf32, #tpu.memory_space<vmem>>, vector<1x128x128xf32>
    %51 = vector.shape_cast %50 : vector<1x128x128xf32> to vector<128x128xf32>
    %cst_40 = arith.constant dense<0.000000e+00> : vector<8x128xf32>
    %52 = tpu.matmul %42, %51, %cst_40 {dimension_numbers = #tpu.dot_dimension_numbers<[1], [0], [0], [1], [0, 0, 1, 1], [], []>} : vector<8x128xf32>, vector<128x128xf32>, vector<8x128xf32> -> vector<8x128xf32>
    %53 = arith.addf %49, %52 : vector<8x128xf32>
    %54 = math.tanh %53 : vector<8x128xf32>
    %55 = arith.index_cast %c3_i32 : i32 to index
    %c0_41 = arith.constant 0 : index
    %c0_42 = arith.constant 0 : index
    %56 = vector.load %arg9[%55, %c0_41, %c0_42] : memref<8x8x128xf32, #tpu.memory_space<vmem>>, vector<1x8x128xf32>
    %57 = vector.shape_cast %56 : vector<1x8x128xf32> to vector<8x128xf32>
    %58 = vector.shape_cast %54 : vector<8x128xf32> to vector<1x8x128xf32>
    tpu.vector_store %arg9[%55, %c0_41, %c0_42], %58 {strides = array<i32>} : memref<8x8x128xf32, #tpu.memory_space<vmem>>, vector<1x8x128xf32>,
    %c4_i32 = arith.constant 4 : i32
    %59 = arith.index_cast %c4_i32 : i32 to index
    %c0_43 = arith.constant 0 : index
    %c0_44 = arith.constant 0 : index
    %60 = vector.load %arg9[%59, %c0_43, %c0_44] : memref<8x8x128xf32, #tpu.memory_space<vmem>>, vector<1x8x128xf32>
    %61 = vector.shape_cast %60 : vector<1x8x128xf32> to vector<8x128xf32>
    %c0_45 = arith.constant 0 : index
    %c0_46 = arith.constant 0 : index
    %c0_47 = arith.constant 0 : index
    %62 = vector.load %arg4[%c0_45, %c0_46, %c0_47] : memref<2x128x128xf32, #tpu.memory_space<vmem>>, vector<1x128x128xf32>
    %63 = vector.shape_cast %62 : vector<1x128x128xf32> to vector<128x128xf32>
    %cst_48 = arith.constant dense<0.000000e+00> : vector<8x128xf32>
    %64 = tpu.matmul %54, %63, %cst_48 {dimension_numbers = #tpu.dot_dimension_numbers<[1], [0], [0], [1], [0, 0, 1, 1], [], []>} : vector<8x128xf32>, vector<128x128xf32>, vector<8x128xf32> -> vector<8x128xf32>
    %65 = arith.addf %61, %64 : vector<8x128xf32>
    %66 = math.tanh %65 : vector<8x128xf32>
    %67 = arith.index_cast %c4_i32 : i32 to index
    %c0_49 = arith.constant 0 : index
    %c0_50 = arith.constant 0 : index
    %68 = vector.load %arg9[%67, %c0_49, %c0_50] : memref<8x8x128xf32, #tpu.memory_space<vmem>>, vector<1x8x128xf32>
    %69 = vector.shape_cast %68 : vector<1x8x128xf32> to vector<8x128xf32>
    %70 = vector.shape_cast %66 : vector<8x128xf32> to vector<1x8x128xf32>
    tpu.vector_store %arg9[%67, %c0_49, %c0_50], %70 {strides = array<i32>} : memref<8x8x128xf32, #tpu.memory_space<vmem>>, vector<1x8x128xf32>,
    %c5_i32 = arith.constant 5 : i32
    %71 = arith.index_cast %c5_i32 : i32 to index
    %c0_51 = arith.constant 0 : index
    %c0_52 = arith.constant 0 : index
    %72 = vector.load %arg9[%71, %c0_51, %c0_52] : memref<8x8x128xf32, #tpu.memory_space<vmem>>, vector<1x8x128xf32>
    %73 = vector.shape_cast %72 : vector<1x8x128xf32> to vector<8x128xf32>
    %c0_53 = arith.constant 0 : index
    %c0_54 = arith.constant 0 : index
    %c0_55 = arith.constant 0 : index
    %74 = vector.load %arg4[%c0_53, %c0_54, %c0_55] : memref<2x128x128xf32, #tpu.memory_space<vmem>>, vector<1x128x128xf32>
    %75 = vector.shape_cast %74 : vector<1x128x128xf32> to vector<128x128xf32>
    %cst_56 = arith.constant dense<0.000000e+00> : vector<8x128xf32>
    %76 = tpu.matmul %66, %75, %cst_56 {dimension_numbers = #tpu.dot_dimension_numbers<[1], [0], [0], [1], [0, 0, 1, 1], [], []>} : vector<8x128xf32>, vector<128x128xf32>, vector<8x128xf32> -> vector<8x128xf32>
    %77 = arith.addf %73, %76 : vector<8x128xf32>
    %78 = math.tanh %77 : vector<8x128xf32>
    %79 = arith.index_cast %c5_i32 : i32 to index
    %c0_57 = arith.constant 0 : index
    %c0_58 = arith.constant 0 : index
    %80 = vector.load %arg9[%79, %c0_57, %c0_58] : memref<8x8x128xf32, #tpu.memory_space<vmem>>, vector<1x8x128xf32>
    %81 = vector.shape_cast %80 : vector<1x8x128xf32> to vector<8x128xf32>
    %82 = vector.shape_cast %78 : vector<8x128xf32> to vector<1x8x128xf32>
    tpu.vector_store %arg9[%79, %c0_57, %c0_58], %82 {strides = array<i32>} : memref<8x8x128xf32, #tpu.memory_space<vmem>>, vector<1x8x128xf32>,
    %c6_i32 = arith.constant 6 : i32
    %83 = arith.index_cast %c6_i32 : i32 to index
    %c0_59 = arith.constant 0 : index
    %c0_60 = arith.constant 0 : index
    %84 = vector.load %arg9[%83, %c0_59, %c0_60] : memref<8x8x128xf32, #tpu.memory_space<vmem>>, vector<1x8x128xf32>
    %85 = vector.shape_cast %84 : vector<1x8x128xf32> to vector<8x128xf32>
    %c0_61 = arith.constant 0 : index
    %c0_62 = arith.constant 0 : index
    %c0_63 = arith.constant 0 : index
    %86 = vector.load %arg4[%c0_61, %c0_62, %c0_63] : memref<2x128x128xf32, #tpu.memory_space<vmem>>, vector<1x128x128xf32>
    %87 = vector.shape_cast %86 : vector<1x128x128xf32> to vector<128x128xf32>
    %cst_64 = arith.constant dense<0.000000e+00> : vector<8x128xf32>
    %88 = tpu.matmul %78, %87, %cst_64 {dimension_numbers = #tpu.dot_dimension_numbers<[1], [0], [0], [1], [0, 0, 1, 1], [], []>} : vector<8x128xf32>, vector<128x128xf32>, vector<8x128xf32> -> vector<8x128xf32>
    %89 = arith.addf %85, %88 : vector<8x128xf32>
    %90 = math.tanh %89 : vector<8x128xf32>
    %91 = arith.index_cast %c6_i32 : i32 to index
    %c0_65 = arith.constant 0 : index
    %c0_66 = arith.constant 0 : index
    %92 = vector.load %arg9[%91, %c0_65, %c0_66] : memref<8x8x128xf32, #tpu.memory_space<vmem>>, vector<1x8x128xf32>
    %93 = vector.shape_cast %92 : vector<1x8x128xf32> to vector<8x128xf32>
    %94 = vector.shape_cast %90 : vector<8x128xf32> to vector<1x8x128xf32>
    tpu.vector_store %arg9[%91, %c0_65, %c0_66], %94 {strides = array<i32>} : memref<8x8x128xf32, #tpu.memory_space<vmem>>, vector<1x8x128xf32>,
    %c7_i32 = arith.constant 7 : i32
    %95 = arith.index_cast %c7_i32 : i32 to index
    %c0_67 = arith.constant 0 : index
    %c0_68 = arith.constant 0 : index
    %96 = vector.load %arg9[%95, %c0_67, %c0_68] : memref<8x8x128xf32, #tpu.memory_space<vmem>>, vector<1x8x128xf32>
    %97 = vector.shape_cast %96 : vector<1x8x128xf32> to vector<8x128xf32>
    %c0_69 = arith.constant 0 : index
    %c0_70 = arith.constant 0 : index
    %c0_71 = arith.constant 0 : index
    %98 = vector.load %arg4[%c0_69, %c0_70, %c0_71] : memref<2x128x128xf32, #tpu.memory_space<vmem>>, vector<1x128x128xf32>
    %99 = vector.shape_cast %98 : vector<1x128x128xf32> to vector<128x128xf32>
    %cst_72 = arith.constant dense<0.000000e+00> : vector<8x128xf32>
    %100 = tpu.matmul %90, %99, %cst_72 {dimension_numbers = #tpu.dot_dimension_numbers<[1], [0], [0], [1], [0, 0, 1, 1], [], []>} : vector<8x128xf32>, vector<128x128xf32>, vector<8x128xf32> -> vector<8x128xf32>
    %101 = arith.addf %97, %100 : vector<8x128xf32>
    %102 = math.tanh %101 : vector<8x128xf32>
    %103 = arith.index_cast %c7_i32 : i32 to index
    %c0_73 = arith.constant 0 : index
    %c0_74 = arith.constant 0 : index
    %104 = vector.load %arg9[%103, %c0_73, %c0_74] : memref<8x8x128xf32, #tpu.memory_space<vmem>>, vector<1x8x128xf32>
    %105 = vector.shape_cast %104 : vector<1x8x128xf32> to vector<8x128xf32>
    %106 = vector.shape_cast %102 : vector<8x128xf32> to vector<1x8x128xf32>
    tpu.vector_store %arg9[%103, %c0_73, %c0_74], %106 {strides = array<i32>} : memref<8x8x128xf32, #tpu.memory_space<vmem>>, vector<1x8x128xf32>,
    %c8_i32 = arith.constant 8 : i32
    %c0_75 = arith.constant 0 : index
    %c0_76 = arith.constant 0 : index
    %c0_77 = arith.constant 0 : index
    %107 = vector.load %arg9[%c0_75, %c0_76, %c0_77] : memref<8x8x128xf32, #tpu.memory_space<vmem>>, vector<8x8x128xf32>
    %108 = vector.shape_cast %107 : vector<8x8x128xf32> to vector<64x128xf32>
    %c0_78 = arith.constant 0 : index
    %c0_79 = arith.constant 0 : index
    %c0_80 = arith.constant 0 : index
    %109 = vector.load %arg3[%c0_78, %c0_79, %c0_80] : memref<1x128x128xf32, #tpu.memory_space<vmem>>, vector<1x128x128xf32>
    %110 = vector.shape_cast %109 : vector<1x128x128xf32> to vector<128x128xf32>
    %cst_81 = arith.constant dense<0.000000e+00> : vector<64x128xf32>
    %111 = tpu.matmul %108, %110, %cst_81 {dimension_numbers = #tpu.dot_dimension_numbers<[1], [0], [0], [1], [0, 0, 1, 1], [], []>} : vector<64x128xf32>, vector<128x128xf32>, vector<64x128xf32> -> vector<64x128xf32>
    %c1 = arith.constant 1 : index
    %c0_82 = arith.constant 0 : index
    %c0_83 = arith.constant 0 : index
    %112 = vector.load %arg5[%c1, %c0_82, %c0_83] : memref<2x1x128xf32, #tpu.memory_space<vmem>>, vector<1x1x128xf32>
    %113 = vector.shape_cast %112 : vector<1x1x128xf32> to vector<1x128xf32>
    %114 = vector.broadcast %113 : vector<1x128xf32> to vector<64x128xf32>
    %115 = arith.addf %111, %114 : vector<64x128xf32>
    %116 = vector.shape_cast %115 : vector<64x128xf32> to vector<8x8x128xf32>
    %c0_84 = arith.constant 0 : index
    %c0_85 = arith.constant 0 : index
    %c0_86 = arith.constant 0 : index
    %117 = vector.load %arg9[%c0_84, %c0_85, %c0_86] : memref<8x8x128xf32, #tpu.memory_space<vmem>>, vector<8x8x128xf32>
    tpu.vector_store %arg9[%c0_84, %c0_85, %c0_86], %116 {strides = array<i32>} : memref<8x8x128xf32, #tpu.memory_space<vmem>>, vector<8x8x128xf32>,
    %cst_87 = arith.constant 0.000000e+00 : f32
    %118 = vector.broadcast %cst_87 : f32 to vector<8x128xf32>
    %c0_i32_88 = arith.constant 0 : i32
    %119 = arith.index_cast %c0_i32_88 : i32 to index
    %c0_89 = arith.constant 0 : index
    %c0_90 = arith.constant 0 : index
    %120 = vector.load %arg9[%119, %c0_89, %c0_90] : memref<8x8x128xf32, #tpu.memory_space<vmem>>, vector<1x8x128xf32>
    %121 = vector.shape_cast %120 : vector<1x8x128xf32> to vector<8x128xf32>
    %c1_91 = arith.constant 1 : index
    %c0_92 = arith.constant 0 : index
    %c0_93 = arith.constant 0 : index
    %122 = vector.load %arg4[%c1_91, %c0_92, %c0_93] : memref<2x128x128xf32, #tpu.memory_space<vmem>>, vector<1x128x128xf32>
    %123 = vector.shape_cast %122 : vector<1x128x128xf32> to vector<128x128xf32>
    %cst_94 = arith.constant dense<0.000000e+00> : vector<8x128xf32>
    %124 = tpu.matmul %118, %123, %cst_94 {dimension_numbers = #tpu.dot_dimension_numbers<[1], [0], [0], [1], [0, 0, 1, 1], [], []>} : vector<8x128xf32>, vector<128x128xf32>, vector<8x128xf32> -> vector<8x128xf32>
    %125 = arith.addf %121, %124 : vector<8x128xf32>
    %126 = math.tanh %125 : vector<8x128xf32>
    %c1_i32_95 = arith.constant 1 : i32
    %127 = arith.index_cast %c1_i32_95 : i32 to index
    %c0_96 = arith.constant 0 : index
    %c0_97 = arith.constant 0 : index
    %128 = vector.load %arg9[%127, %c0_96, %c0_97] : memref<8x8x128xf32, #tpu.memory_space<vmem>>, vector<1x8x128xf32>
    %129 = vector.shape_cast %128 : vector<1x8x128xf32> to vector<8x128xf32>
    %c1_98 = arith.constant 1 : index
    %c0_99 = arith.constant 0 : index
    %c0_100 = arith.constant 0 : index
    %130 = vector.load %arg4[%c1_98, %c0_99, %c0_100] : memref<2x128x128xf32, #tpu.memory_space<vmem>>, vector<1x128x128xf32>
    %131 = vector.shape_cast %130 : vector<1x128x128xf32> to vector<128x128xf32>
    %cst_101 = arith.constant dense<0.000000e+00> : vector<8x128xf32>
    %132 = tpu.matmul %126, %131, %cst_101 {dimension_numbers = #tpu.dot_dimension_numbers<[1], [0], [0], [1], [0, 0, 1, 1], [], []>} : vector<8x128xf32>, vector<128x128xf32>, vector<8x128xf32> -> vector<8x128xf32>
    %133 = arith.addf %129, %132 : vector<8x128xf32>
    %134 = math.tanh %133 : vector<8x128xf32>
    %c2_i32_102 = arith.constant 2 : i32
    %135 = arith.index_cast %c2_i32_102 : i32 to index
    %c0_103 = arith.constant 0 : index
    %c0_104 = arith.constant 0 : index
    %136 = vector.load %arg9[%135, %c0_103, %c0_104] : memref<8x8x128xf32, #tpu.memory_space<vmem>>, vector<1x8x128xf32>
    %137 = vector.shape_cast %136 : vector<1x8x128xf32> to vector<8x128xf32>
    %c1_105 = arith.constant 1 : index
    %c0_106 = arith.constant 0 : index
    %c0_107 = arith.constant 0 : index
    %138 = vector.load %arg4[%c1_105, %c0_106, %c0_107] : memref<2x128x128xf32, #tpu.memory_space<vmem>>, vector<1x128x128xf32>
    %139 = vector.shape_cast %138 : vector<1x128x128xf32> to vector<128x128xf32>
    %cst_108 = arith.constant dense<0.000000e+00> : vector<8x128xf32>
    %140 = tpu.matmul %134, %139, %cst_108 {dimension_numbers = #tpu.dot_dimension_numbers<[1], [0], [0], [1], [0, 0, 1, 1], [], []>} : vector<8x128xf32>, vector<128x128xf32>, vector<8x128xf32> -> vector<8x128xf32>
    %141 = arith.addf %137, %140 : vector<8x128xf32>
    %142 = math.tanh %141 : vector<8x128xf32>
    %c3_i32_109 = arith.constant 3 : i32
    %143 = arith.index_cast %c3_i32_109 : i32 to index
    %c0_110 = arith.constant 0 : index
    %c0_111 = arith.constant 0 : index
    %144 = vector.load %arg9[%143, %c0_110, %c0_111] : memref<8x8x128xf32, #tpu.memory_space<vmem>>, vector<1x8x128xf32>
    %145 = vector.shape_cast %144 : vector<1x8x128xf32> to vector<8x128xf32>
    %c1_112 = arith.constant 1 : index
    %c0_113 = arith.constant 0 : index
    %c0_114 = arith.constant 0 : index
    %146 = vector.load %arg4[%c1_112, %c0_113, %c0_114] : memref<2x128x128xf32, #tpu.memory_space<vmem>>, vector<1x128x128xf32>
    %147 = vector.shape_cast %146 : vector<1x128x128xf32> to vector<128x128xf32>
    %cst_115 = arith.constant dense<0.000000e+00> : vector<8x128xf32>
    %148 = tpu.matmul %142, %147, %cst_115 {dimension_numbers = #tpu.dot_dimension_numbers<[1], [0], [0], [1], [0, 0, 1, 1], [], []>} : vector<8x128xf32>, vector<128x128xf32>, vector<8x128xf32> -> vector<8x128xf32>
    %149 = arith.addf %145, %148 : vector<8x128xf32>
    %150 = math.tanh %149 : vector<8x128xf32>
    %c4_i32_116 = arith.constant 4 : i32
    %151 = arith.index_cast %c4_i32_116 : i32 to index
    %c0_117 = arith.constant 0 : index
    %c0_118 = arith.constant 0 : index
    %152 = vector.load %arg9[%151, %c0_117, %c0_118] : memref<8x8x128xf32, #tpu.memory_space<vmem>>, vector<1x8x128xf32>
    %153 = vector.shape_cast %152 : vector<1x8x128xf32> to vector<8x128xf32>
    %c1_119 = arith.constant 1 : index
    %c0_120 = arith.constant 0 : index
    %c0_121 = arith.constant 0 : index
    %154 = vector.load %arg4[%c1_119, %c0_120, %c0_121] : memref<2x128x128xf32, #tpu.memory_space<vmem>>, vector<1x128x128xf32>
    %155 = vector.shape_cast %154 : vector<1x128x128xf32> to vector<128x128xf32>
    %cst_122 = arith.constant dense<0.000000e+00> : vector<8x128xf32>
    %156 = tpu.matmul %150, %155, %cst_122 {dimension_numbers = #tpu.dot_dimension_numbers<[1], [0], [0], [1], [0, 0, 1, 1], [], []>} : vector<8x128xf32>, vector<128x128xf32>, vector<8x128xf32> -> vector<8x128xf32>
    %157 = arith.addf %153, %156 : vector<8x128xf32>
    %158 = math.tanh %157 : vector<8x128xf32>
    %c5_i32_123 = arith.constant 5 : i32
    %159 = arith.index_cast %c5_i32_123 : i32 to index
    %c0_124 = arith.constant 0 : index
    %c0_125 = arith.constant 0 : index
    %160 = vector.load %arg9[%159, %c0_124, %c0_125] : memref<8x8x128xf32, #tpu.memory_space<vmem>>, vector<1x8x128xf32>
    %161 = vector.shape_cast %160 : vector<1x8x128xf32> to vector<8x128xf32>
    %c1_126 = arith.constant 1 : index
    %c0_127 = arith.constant 0 : index
    %c0_128 = arith.constant 0 : index
    %162 = vector.load %arg4[%c1_126, %c0_127, %c0_128] : memref<2x128x128xf32, #tpu.memory_space<vmem>>, vector<1x128x128xf32>
    %163 = vector.shape_cast %162 : vector<1x128x128xf32> to vector<128x128xf32>
    %cst_129 = arith.constant dense<0.000000e+00> : vector<8x128xf32>
    %164 = tpu.matmul %158, %163, %cst_129 {dimension_numbers = #tpu.dot_dimension_numbers<[1], [0], [0], [1], [0, 0, 1, 1], [], []>} : vector<8x128xf32>, vector<128x128xf32>, vector<8x128xf32> -> vector<8x128xf32>
    %165 = arith.addf %161, %164 : vector<8x128xf32>
    %166 = math.tanh %165 : vector<8x128xf32>
    %c6_i32_130 = arith.constant 6 : i32
    %167 = arith.index_cast %c6_i32_130 : i32 to index
    %c0_131 = arith.constant 0 : index
    %c0_132 = arith.constant 0 : index
    %168 = vector.load %arg9[%167, %c0_131, %c0_132] : memref<8x8x128xf32, #tpu.memory_space<vmem>>, vector<1x8x128xf32>
    %169 = vector.shape_cast %168 : vector<1x8x128xf32> to vector<8x128xf32>
    %c1_133 = arith.constant 1 : index
    %c0_134 = arith.constant 0 : index
    %c0_135 = arith.constant 0 : index
    %170 = vector.load %arg4[%c1_133, %c0_134, %c0_135] : memref<2x128x128xf32, #tpu.memory_space<vmem>>, vector<1x128x128xf32>
    %171 = vector.shape_cast %170 : vector<1x128x128xf32> to vector<128x128xf32>
    %cst_136 = arith.constant dense<0.000000e+00> : vector<8x128xf32>
    %172 = tpu.matmul %166, %171, %cst_136 {dimension_numbers = #tpu.dot_dimension_numbers<[1], [0], [0], [1], [0, 0, 1, 1], [], []>} : vector<8x128xf32>, vector<128x128xf32>, vector<8x128xf32> -> vector<8x128xf32>
    %173 = arith.addf %169, %172 : vector<8x128xf32>
    %174 = math.tanh %173 : vector<8x128xf32>
    %c7_i32_137 = arith.constant 7 : i32
    %175 = arith.index_cast %c7_i32_137 : i32 to index
    %c0_138 = arith.constant 0 : index
    %c0_139 = arith.constant 0 : index
    %176 = vector.load %arg9[%175, %c0_138, %c0_139] : memref<8x8x128xf32, #tpu.memory_space<vmem>>, vector<1x8x128xf32>
    %177 = vector.shape_cast %176 : vector<1x8x128xf32> to vector<8x128xf32>
    %c1_140 = arith.constant 1 : index
    %c0_141 = arith.constant 0 : index
    %c0_142 = arith.constant 0 : index
    %178 = vector.load %arg4[%c1_140, %c0_141, %c0_142] : memref<2x128x128xf32, #tpu.memory_space<vmem>>, vector<1x128x128xf32>
    %179 = vector.shape_cast %178 : vector<1x128x128xf32> to vector<128x128xf32>
    %cst_143 = arith.constant dense<0.000000e+00> : vector<8x128xf32>
    %180 = tpu.matmul %174, %179, %cst_143 {dimension_numbers = #tpu.dot_dimension_numbers<[1], [0], [0], [1], [0, 0, 1, 1], [], []>} : vector<8x128xf32>, vector<128x128xf32>, vector<8x128xf32> -> vector<8x128xf32>
    %181 = arith.addf %177, %180 : vector<8x128xf32>
    %182 = math.tanh %181 : vector<8x128xf32>
    %c8_i32_144 = arith.constant 8 : i32
    %c0_145 = arith.constant 0 : index
    %c0_146 = arith.constant 0 : index
    %183 = vector.load %arg6[%c0_145, %c0_146] : memref<128x128xf32, #tpu.memory_space<vmem>>, vector<128x128xf32>
    %cst_147 = arith.constant dense<0.000000e+00> : vector<8x128xf32>
    %184 = tpu.matmul %182, %183, %cst_147 {dimension_numbers = #tpu.dot_dimension_numbers<[1], [0], [0], [1], [0, 0, 1, 1], [], []>} : vector<8x128xf32>, vector<128x128xf32>, vector<8x128xf32> -> vector<8x128xf32>
    %c0_148 = arith.constant 0 : index
    %c0_149 = arith.constant 0 : index
    %185 = vector.load %arg7[%c0_148, %c0_149] : memref<1x128xf32, #tpu.memory_space<vmem>>, vector<1x128xf32>
    %186 = vector.broadcast %185 : vector<1x128xf32> to vector<8x128xf32>
    %187 = arith.addf %184, %186 : vector<8x128xf32>
    %c0_150 = arith.constant 0 : index
    %c0_151 = arith.constant 0 : index
    %188 = vector.load %arg8[%c0_150, %c0_151] : memref<8x128xf32, #tpu.memory_space<vmem>>, vector<8x128xf32>
    tpu.vector_store %arg8[%c0_150, %c0_151], %187 {strides = array<i32>} : memref<8x128xf32, #tpu.memory_space<vmem>>, vector<8x128xf32>,
    return
  }
  func.func @transform_0(%arg0: i32) -> (i32, i32, i32) {
    %c0_i32 = arith.constant 0 : i32
    %c0_i32_0 = arith.constant 0 : i32
    %c0_i32_1 = arith.constant 0 : i32
    %c0_i32_2 = arith.constant 0 : i32
    return %c0_i32, %c0_i32_0, %c0_i32_1 : i32, i32, i32
  }
  func.func @transform_1(%arg0: i32) -> (i32, i32) {
    %c0_i32 = arith.constant 0 : i32
    %c0_i32_0 = arith.constant 0 : i32
    %c0_i32_1 = arith.constant 0 : i32
    return %c0_i32, %c0_i32_0 : i32, i32
  }
  func.func @transform_2(%arg0: i32) -> (i32, i32, i32) {
    %c0_i32 = arith.constant 0 : i32
    %c0_i32_0 = arith.constant 0 : i32
    %c0_i32_1 = arith.constant 0 : i32
    %c0_i32_2 = arith.constant 0 : i32
    return %c0_i32, %c0_i32_0, %c0_i32_1 : i32, i32, i32
  }
  func.func @transform_3(%arg0: i32) -> (i32, i32, i32) {
    %c0_i32 = arith.constant 0 : i32
    %c0_i32_0 = arith.constant 0 : i32
    %c0_i32_1 = arith.constant 0 : i32
    %c0_i32_2 = arith.constant 0 : i32
    return %c0_i32, %c0_i32_0, %c0_i32_1 : i32, i32, i32
  }
  func.func @transform_4(%arg0: i32) -> (i32, i32, i32) {
    %c0_i32 = arith.constant 0 : i32
    %c0_i32_0 = arith.constant 0 : i32
    %c0_i32_1 = arith.constant 0 : i32
    %c0_i32_2 = arith.constant 0 : i32
    return %c0_i32, %c0_i32_0, %c0_i32_1 : i32, i32, i32
  }
  func.func @transform_5(%arg0: i32) -> (i32, i32) {
    %c0_i32 = arith.constant 0 : i32
    %c0_i32_0 = arith.constant 0 : i32
    %c0_i32_1 = arith.constant 0 : i32
    return %c0_i32, %c0_i32_0 : i32, i32
  }
  func.func @transform_6(%arg0: i32) -> (i32, i32) {
    %c0_i32 = arith.constant 0 : i32
    %c0_i32_0 = arith.constant 0 : i32
    %c0_i32_1 = arith.constant 0 : i32
    return %c0_i32, %c0_i32_0 : i32, i32
  }
  func.func @transform_7(%arg0: i32) -> (i32, i32) {
    %c0_i32 = arith.constant 0 : i32
    %c0_i32_0 = arith.constant 0 : i32
    %c0_i32_1 = arith.constant 0 : i32
    return %c0_i32, %c0_i32_0 : i32, i32
  }
}

</mosaic_0001>

<llo_original>
// kernel: tpu_custom_call.1
$region0: #{tpu_custom_call.1}
  #allocation0 [shape = 'u32[]', space=smem, size = 0x4, offset = 0x4, fixed_abs, tag = 'smem constant byte address 0x4 - core index']
  #allocation1 [shape = 'u32[72,128]{1,0:T(1,128)}', space=vmem, size = 0x9000, scoped, tag = 'internal scratch']
  #allocation2 [shape = 'f32[8,8,128]{2,1,0:T(8,128)}', space=vmem, size = 0x8000, scoped, tag = 'scratch operand']
  %s0 = inlined_call_operand.hbm [shape: f32[8,8,128], index: 0, kind: input, shape index: {}]
  %s1 = inlined_call_operand.hbm [shape: f32[128,128], index: 1, kind: input, shape index: {}]
  %s2 = inlined_call_operand.hbm [shape: f32[1,128,128], index: 2, kind: input, shape index: {}]
  %s3 = inlined_call_operand.hbm [shape: f32[2,128,128], index: 3, kind: input, shape index: {}]
  %s4 = inlined_call_operand.vmem [shape: f32[2,1,128], index: 4, kind: input, shape index: {}]
  %s5 = inlined_call_operand.hbm [shape: f32[128,128], index: 5, kind: input, shape index: {}]
  %s6 = inlined_call_operand.vmem [shape: f32[1,128], index: 6, kind: input, shape index: {}]
  %s7 = inlined_call_operand.hbm [shape: f32[8,128], index: 7, kind: output, shape index: {}]
  %s8 = sld [smem:[#allocation0]]
  $region58: #{tpu_custom_call.1} parent=0
    _
  %s10 = ssub.s32 1, %s8
  %s11 = scalar_select 0, %s10, %s8
  $region1: #{tpu_custom_call.1} parent=0
    #allocation3 [shape = 'u8[32768]{0}', space=vmem, size = 0x8000, scoped, tag = 'input window, operand 0, single buffered']
    #allocation4 [shape = 's32[1]{0}', space=sflag, size = 0x4, scoped, tag = 'scoped memory for tpu_custom_call.1']
    #allocation5 [shape = 's32[1]{0}', space=sflag, size = 0x4, scoped, tag = 'scoped memory for tpu_custom_call.1']
    #allocation6 [shape = 'u8[65536]{0}', space=vmem, size = 0x10000, scoped, tag = 'input window, operand 1, single buffered']
    #allocation7 [shape = 's32[1]{0}', space=sflag, size = 0x4, scoped, tag = 'scoped memory for tpu_custom_call.1']
    #allocation8 [shape = 'u8[65536]{0}', space=vmem, size = 0x10000, scoped, tag = 'input window, operand 2, single buffered']
    #allocation9 [shape = 'u8[131072]{0}', space=vmem, size = 0x20000, scoped, tag = 'input window, operand 3, single buffered']
    #allocation10 [shape = 's32[1]{0}', space=sflag, size = 0x4, scoped, tag = 'scoped memory for tpu_custom_call.1']
    #allocation11 [shape = 'u8[65536]{0}', space=vmem, size = 0x10000, scoped, tag = 'input window, operand 5, single buffered']
    #allocation12 [shape = 'u8[4096]{0}', space=vmem, size = 0x1000, scoped, tag = 'output window, operand 0, single buffered']
    %12 = vsyncpa [#allocation4], 0
    %13 = vsyncpa [#allocation7], 0
    %14 = vsyncpa [#allocation10], 0
    %15 = vsyncpa [#allocation5], 0
    // Predicated region
    $region2: #{tpu_custom_call.1} parent=1 // pred_check
      _
    $region3: #{tpu_custom_call.1} parent=1 // pred_check_branch
      %17 = sbr.rel (0) target = $region5
    $region4: #{tpu_custom_call.1} parent=1 // pred_region
      %19 = vsyncadd [#allocation4], 0
      %s20 = sshll.u32 %s0, 4
      %s21 = int_to_ptr.hbm [resolvable:$true] %s20
      %s22 = sshll.u32 [#allocation3], 4
      %s23 = int_to_ptr.vmem [resolvable:$true] %s22
      %28 = dma.hbm_to_vmem [thread:$0]  %s21, 1024, %s23, [#allocation4], 128, 128, 8
    $region5: #{tpu_custom_call.1} parent=1 // pred_fallthru
      _
    // Predicated region
    $region6: #{tpu_custom_call.1} parent=1 // pred_check
      _
    $region7: #{tpu_custom_call.1} parent=1 // pred_check_branch
      %30 = sbr.rel (0) target = $region9
    $region8: #{tpu_custom_call.1} parent=1 // pred_region
      %32 = vsyncadd [#allocation7], 0
      %s33 = sshll.u32 %s1, 4
      %s34 = int_to_ptr.hbm [resolvable:$true] %s33
      %s35 = sshll.u32 [#allocation6], 4
      %s36 = int_to_ptr.vmem [resolvable:$true] %s35
      %41 = dma.hbm_to_vmem [thread:$0]  %s34, 2048, %s36, [#allocation7], 128, 128, 8
    $region9: #{tpu_custom_call.1} parent=1 // pred_fallthru
      _
    // Predicated region
    $region10: #{tpu_custom_call.1} parent=1 // pred_check
      _
    $region11: #{tpu_custom_call.1} parent=1 // pred_check_branch
      %43 = sbr.rel (0) target = $region13
    $region12: #{tpu_custom_call.1} parent=1 // pred_region
      %45 = vsyncadd [#allocation7], 0
      %s46 = sshll.u32 %s2, 4
      %s47 = int_to_ptr.hbm [resolvable:$true] %s46
      %s48 = sshll.u32 [#allocation8], 4
      %s49 = int_to_ptr.vmem [resolvable:$true] %s48
      %54 = dma.hbm_to_vmem [thread:$0]  %s47, 2048, %s49, [#allocation7], 128, 128, 8
    $region13: #{tpu_custom_call.1} parent=1 // pred_fallthru
      _
    // Predicated region
    $region14: #{tpu_custom_call.1} parent=1 // pred_check
      _
    $region15: #{tpu_custom_call.1} parent=1 // pred_check_branch
      %56 = sbr.rel (0) target = $region17
    $region16: #{tpu_custom_call.1} parent=1 // pred_region
      %58 = vsyncadd [#allocation10], 0
      %s59 = sshll.u32 %s3, 4
      %s60 = int_to_ptr.hbm [resolvable:$true] %s59
      %s61 = sshll.u32 [#allocation9], 4
      %s62 = int_to_ptr.vmem [resolvable:$true] %s61
      %67 = dma.hbm_to_vmem [thread:$0]  %s60, 4096, %s62, [#allocation10], 128, 128, 8
    $region17: #{tpu_custom_call.1} parent=1 // pred_fallthru
      _
    // Predicated region
    $region18: #{tpu_custom_call.1} parent=1 // pred_check
      _
    $region19: #{tpu_custom_call.1} parent=1 // pred_check_branch
      %69 = sbr.rel (0) target = $region21
    $region20: #{tpu_custom_call.1} parent=1 // pred_region
      _
    $region21: #{tpu_custom_call.1} parent=1 // pred_fallthru
      _
    // Predicated region
    $region22: #{tpu_custom_call.1} parent=1 // pred_check
      _
    $region23: #{tpu_custom_call.1} parent=1 // pred_check_branch
      %71 = sbr.rel (0) target = $region25
    $region24: #{tpu_custom_call.1} parent=1 // pred_region
      %73 = vsyncadd [#allocation10], 0
      %s74 = sshll.u32 %s5, 4
      %s75 = int_to_ptr.hbm [resolvable:$true] %s74
      %s76 = sshll.u32 [#allocation11], 4
      %s77 = int_to_ptr.vmem [resolvable:$true] %s76
      %82 = dma.hbm_to_vmem [thread:$0]  %s75, 2048, %s77, [#allocation10], 128, 128, 8
    $region25: #{tpu_custom_call.1} parent=1 // pred_fallthru
      _
    // Predicated region
    $region26: #{tpu_custom_call.1} parent=1 // pred_check
      _
    $region27: #{tpu_custom_call.1} parent=1 // pred_check_branch
      %84 = sbr.rel (0) target = $region29
    $region28: #{tpu_custom_call.1} parent=1 // pred_region
      _
    $region29: #{tpu_custom_call.1} parent=1 // pred_fallthru
      _
    // Predicated region
    $region30: #{tpu_custom_call.1} parent=1 // pred_check
      _
    $region31: #{tpu_custom_call.1} parent=1 // pred_check_branch
      %86 = sbr.rel (0) target = $region33
    $region32: #{tpu_custom_call.1} parent=1 // pred_region
      %88 = dma.done [#allocation4], 1024
    $region33: #{tpu_custom_call.1} parent=1 // pred_fallthru
      _
    // Predicated region
    $region34: #{tpu_custom_call.1} parent=1 // pred_check
      _
    $region35: #{tpu_custom_call.1} parent=1 // pred_check_branch
      %90 = sbr.rel (0) target = $region37
    $region36: #{tpu_custom_call.1} parent=1 // pred_region
      %92 = dma.done [#allocation7], 2048
    $region37: #{tpu_custom_call.1} parent=1 // pred_fallthru
      _
    // Predicated region
    $region38: #{tpu_custom_call.1} parent=1 // pred_check
      _
    $region39: #{tpu_custom_call.1} parent=1 // pred_check_branch
      %94 = sbr.rel (0) target = $region41
    $region40: #{tpu_custom_call.1} parent=1 // pred_region
      %96 = dma.done [#allocation7], 2048
    $region41: #{tpu_custom_call.1} parent=1 // pred_fallthru
      _
    // Predicated region
    $region42: #{tpu_custom_call.1} parent=1 // pred_check
      _
    $region43: #{tpu_custom_call.1} parent=1 // pred_check_branch
      %98 = sbr.rel (0) target = $region45
    $region44: #{tpu_custom_call.1} parent=1 // pred_region
      %100 = dma.done [#allocation10], 4096
    $region45: #{tpu_custom_call.1} parent=1 // pred_fallthru
      _
    // Predicated region
    $region46: #{tpu_custom_call.1} parent=1 // pred_check
      _
    $region47: #{tpu_custom_call.1} parent=1 // pred_check_branch
      %102 = sbr.rel (0) target = $region49
    $region48: #{tpu_custom_call.1} parent=1 // pred_region
      %104 = dma.done [#allocation10], 2048
    $region49: #{tpu_custom_call.1} parent=1 // pred_fallthru
      _
    %v105 = vld [vmem:[#allocation3] sm:$0xff]
    %v106 = vld [vmem:[#allocation3 + $0x8] sm:$0xff]
    %v107 = vld [vmem:[#allocation3 + $0x10] sm:$0xff]
    %v108 = vld [vmem:[#allocation3 + $0x18] sm:$0xff]
    %v109 = vld [vmem:[#allocation3 + $0x20] sm:$0xff]
    %v110 = vld [vmem:[#allocation3 + $0x28] sm:$0xff]
    %v111 = vld [vmem:[#allocation3 + $0x30] sm:$0xff]
    %v112 = vld [vmem:[#allocation3 + $0x38] sm:$0xff]
    %v113 = vld [vmem:[#allocation6] sm:$0xff]
    %v114 = vld [vmem:[#allocation6 + $0x8] sm:$0xff]
    %v115 = vld [vmem:[#allocation6 + $0x10] sm:$0xff]
    %v116 = vld [vmem:[#allocation6 + $0x18] sm:$0xff]
    %v117 = vld [vmem:[#allocation6 + $0x20] sm:$0xff]
    %v118 = vld [vmem:[#allocation6 + $0x28] sm:$0xff]
    %v119 = vld [vmem:[#allocation6 + $0x30] sm:$0xff]
    %v120 = vld [vmem:[#allocation6 + $0x38] sm:$0xff]
    %v121 = vld [vmem:[#allocation6 + $0x40] sm:$0xff]
    %v122 = vld [vmem:[#allocation6 + $0x48] sm:$0xff]
    %v123 = vld [vmem:[#allocation6 + $0x50] sm:$0xff]
    %v124 = vld [vmem:[#allocation6 + $0x58] sm:$0xff]
    %v125 = vld [vmem:[#allocation6 + $0x60] sm:$0xff]
    %v126 = vld [vmem:[#allocation6 + $0x68] sm:$0xff]
    %v127 = vld [vmem:[#allocation6 + $0x70] sm:$0xff]
    %v128 = vld [vmem:[#allocation6 + $0x78] sm:$0xff]
    %v129 = vld [vmem:[%s4] sm:$0x1]
    %v131 = vperm.slane %v129, 0
    %133 = vmatpush.msra.mxu0 %v128
    %134 = vmatpush.msra.mxu0 %v127
    %135 = vmatpush.msra.mxu0 %v126
    %136 = vmatpush.msra.mxu0 %v125
    %137 = vmatpush.msra.mxu0 %v124
    %138 = vmatpush.msra.mxu0 %v123
    %139 = vmatpush.msra.mxu0 %v122
    %140 = vmatpush.msra.mxu0 %v121
    %141 = vmatpush.msra.mxu0 %v120
    %142 = vmatpush.msra.mxu0 %v119
    %143 = vmatpush.msra.mxu0 %v118
    %144 = vmatpush.msra.mxu0 %v117
    %145 = vmatpush.msra.mxu0 %v116
    %146 = vmatpush.msra.mxu0 %v115
    %147 = vmatpush.msra.mxu0 %v114
    %148 = vmatpush.msra.mxu0 %v113
    %149 = vmatmul.f32.gmra.mxu0 %v105
    %v150 = vpop.f32.mrf.mxu0
    %v151 = vadd.f32 %v131, %v150
    %152 = vmatmul.f32.gmra.mxu0 %v106
    %v153 = vpop.f32.mrf.mxu0
    %v154 = vadd.f32 %v131, %v153
    %155 = vmatmul.f32.gmra.mxu0 %v107
    %v156 = vpop.f32.mrf.mxu0
    %v157 = vadd.f32 %v131, %v156
    %158 = vmatmul.f32.gmra.mxu0 %v108
    %v159 = vpop.f32.mrf.mxu0
    %v160 = vadd.f32 %v131, %v159
    %161 = vmatmul.f32.gmra.mxu0 %v109
    %v162 = vpop.f32.mrf.mxu0
    %v163 = vadd.f32 %v131, %v162
    %164 = vmatmul.f32.gmra.mxu0 %v110
    %v165 = vpop.f32.mrf.mxu0
    %v166 = vadd.f32 %v131, %v165
    %167 = vmatmul.f32.gmra.mxu0 %v111
    %v168 = vpop.f32.mrf.mxu0
    %v169 = vadd.f32 %v131, %v168
    %170 = vmatmul.f32.gmra.mxu0 %v112
    %v171 = vpop.f32.mrf.mxu0
    %v172 = vadd.f32 %v131, %v171
    %173 = vdwg.mxu0
    %174 = vst [vmem:[#allocation2] sm:$0xff] %v151
    %175 = vst [vmem:[#allocation2 + $0x8] sm:$0xff] %v154
    %176 = vst [vmem:[#allocation2 + $0x10] sm:$0xff] %v157
    %177 = vst [vmem:[#allocation2 + $0x18] sm:$0xff] %v160
    %178 = vst [vmem:[#allocation2 + $0x20] sm:$0xff] %v163
    %179 = vst [vmem:[#allocation2 + $0x28] sm:$0xff] %v166
    %180 = vst [vmem:[#allocation2 + $0x30] sm:$0xff] %v169
    %181 = vst [vmem:[#allocation2 + $0x38] sm:$0xff] %v172
    %v182 = vld [vmem:[#allocation2] sm:$0xff]
    %v183 = vld [vmem:[#allocation9] sm:$0xff]
    %v184 = vld [vmem:[#allocation9 + $0x8] sm:$0xff]
    %v185 = vld [vmem:[#allocation9 + $0x10] sm:$0xff]
    %v186 = vld [vmem:[#allocation9 + $0x18] sm:$0xff]
    %v187 = vld [vmem:[#allocation9 + $0x20] sm:$0xff]
    %v188 = vld [vmem:[#allocation9 + $0x28] sm:$0xff]
    %v189 = vld [vmem:[#allocation9 + $0x30] sm:$0xff]
    %v190 = vld [vmem:[#allocation9 + $0x38] sm:$0xff]
    %v191 = vld [vmem:[#allocation9 + $0x40] sm:$0xff]
    %v192 = vld [vmem:[#allocation9 + $0x48] sm:$0xff]
    %v193 = vld [vmem:[#allocation9 + $0x50] sm:$0xff]
    %v194 = vld [vmem:[#allocation9 + $0x58] sm:$0xff]
    %v195 = vld [vmem:[#allocation9 + $0x60] sm:$0xff]
    %v196 = vld [vmem:[#allocation9 + $0x68] sm:$0xff]
    %v197 = vld [vmem:[#allocation9 + $0x70] sm:$0xff]
    %v198 = vld [vmem:[#allocation9 + $0x78] sm:$0xff]
    %199 = vmatpush.msra.mxu0 %v198
    %200 = vmatpush.msra.mxu0 %v197
    %201 = vmatpush.msra.mxu0 %v196
    %202 = vmatpush.msra.mxu0 %v195
    %203 = vmatpush.msra.mxu0 %v194
    %204 = vmatpush.msra.mxu0 %v193
    %205 = vmatpush.msra.mxu0 %v192
    %206 = vmatpush.msra.mxu0 %v191
    %207 = vmatpush.msra.mxu0 %v190
    %208 = vmatpush.msra.mxu0 %v189
    %209 = vmatpush.msra.mxu0 %v188
    %210 = vmatpush.msra.mxu0 %v187
    %211 = vmatpush.msra.mxu0 %v186
    %212 = vmatpush.msra.mxu0 %v185
    %213 = vmatpush.msra.mxu0 %v184
    %214 = vmatpush.msra.mxu0 %v183
    %215 = vmatmul.f32.gmra.mxu0 0.0
    %v216 = vpop.f32.mrf.mxu0
    %v217 = vadd.f32 0.0, %v216
    %218 = vdwg.mxu0
    %v219 = vadd.f32 %v182, %v217
    %v220 = vtanh.pop %v219
    %221 = vst [vmem:[#allocation2] sm:$0xff] %v220
    %s222 = scalar_lea.vmem [#allocation2], 8
    %v223 = vld [vmem:[%s222] sm:$0xff]
    %v224 = vld [vmem:[#allocation9] sm:$0xff]
    %v225 = vld [vmem:[#allocation9 + $0x8] sm:$0xff]
    %v226 = vld [vmem:[#allocation9 + $0x10] sm:$0xff]
    %v227 = vld [vmem:[#allocation9 + $0x18] sm:$0xff]
    %v228 = vld [vmem:[#allocation9 + $0x20] sm:$0xff]
    %v229 = vld [vmem:[#allocation9 + $0x28] sm:$0xff]
    %v230 = vld [vmem:[#allocation9 + $0x30] sm:$0xff]
    %v231 = vld [vmem:[#allocation9 + $0x38] sm:$0xff]
    %v232 = vld [vmem:[#allocation9 + $0x40] sm:$0xff]
    %v233 = vld [vmem:[#allocation9 + $0x48] sm:$0xff]
    %v234 = vld [vmem:[#allocation9 + $0x50] sm:$0xff]
    %v235 = vld [vmem:[#allocation9 + $0x58] sm:$0xff]
    %v236 = vld [vmem:[#allocation9 + $0x60] sm:$0xff]
    %v237 = vld [vmem:[#allocation9 + $0x68] sm:$0xff]
    %v238 = vld [vmem:[#allocation9 + $0x70] sm:$0xff]
    %v239 = vld [vmem:[#allocation9 + $0x78] sm:$0xff]
    %240 = vmatpush.msra.mxu0 %v239
    %241 = vmatpush.msra.mxu0 %v238
    %242 = vmatpush.msra.mxu0 %v237
    %243 = vmatpush.msra.mxu0 %v236
    %244 = vmatpush.msra.mxu0 %v235
    %245 = vmatpush.msra.mxu0 %v234
    %246 = vmatpush.msra.mxu0 %v233
    %247 = vmatpush.msra.mxu0 %v232
    %248 = vmatpush.msra.mxu0 %v231
    %249 = vmatpush.msra.mxu0 %v230
    %250 = vmatpush.msra.mxu0 %v229
    %251 = vmatpush.msra.mxu0 %v228
    %252 = vmatpush.msra.mxu0 %v227
    %253 = vmatpush.msra.mxu0 %v226
    %254 = vmatpush.msra.mxu0 %v225
    %255 = vmatpush.msra.mxu0 %v224
    %256 = vmatmul.f32.gmra.mxu0 %v220
    %v257 = vpop.f32.mrf.mxu0
    %v258 = vadd.f32 0.0, %v257
    %259 = vdwg.mxu0
    %v260 = vadd.f32 %v223, %v258
    %v261 = vtanh.pop %v260
    %262 = vst [vmem:[%s222] sm:$0xff] %v261
    %s263 = scalar_lea.vmem [#allocation2], 16
    %v264 = vld [vmem:[%s263] sm:$0xff]
    %v265 = vld [vmem:[#allocation9] sm:$0xff]
    %v266 = vld [vmem:[#allocation9 + $0x8] sm:$0xff]
    %v267 = vld [vmem:[#allocation9 + $0x10] sm:$0xff]
    %v268 = vld [vmem:[#allocation9 + $0x18] sm:$0xff]
    %v269 = vld [vmem:[#allocation9 + $0x20] sm:$0xff]
    %v270 = vld [vmem:[#allocation9 + $0x28] sm:$0xff]
    %v271 = vld [vmem:[#allocation9 + $0x30] sm:$0xff]
    %v272 = vld [vmem:[#allocation9 + $0x38] sm:$0xff]
    %v273 = vld [vmem:[#allocation9 + $0x40] sm:$0xff]
    %v274 = vld [vmem:[#allocation9 + $0x48] sm:$0xff]
    %v275 = vld [vmem:[#allocation9 + $0x50] sm:$0xff]
    %v276 = vld [vmem:[#allocation9 + $0x58] sm:$0xff]
    %v277 = vld [vmem:[#allocation9 + $0x60] sm:$0xff]
    %v278 = vld [vmem:[#allocation9 + $0x68] sm:$0xff]
    %v279 = vld [vmem:[#allocation9 + $0x70] sm:$0xff]
    %v280 = vld [vmem:[#allocation9 + $0x78] sm:$0xff]
    %281 = vmatpush.msra.mxu0 %v280
    %282 = vmatpush.msra.mxu0 %v279
    %283 = vmatpush.msra.mxu0 %v278
    %284 = vmatpush.msra.mxu0 %v277
    %285 = vmatpush.msra.mxu0 %v276
    %286 = vmatpush.msra.mxu0 %v275
    %287 = vmatpush.msra.mxu0 %v274
    %288 = vmatpush.msra.mxu0 %v273
    %289 = vmatpush.msra.mxu0 %v272
    %290 = vmatpush.msra.mxu0 %v271
    %291 = vmatpush.msra.mxu0 %v270
    %292 = vmatpush.msra.mxu0 %v269
    %293 = vmatpush.msra.mxu0 %v268
    %294 = vmatpush.msra.mxu0 %v267
    %295 = vmatpush.msra.mxu0 %v266
    %296 = vmatpush.msra.mxu0 %v265
    %297 = vmatmul.f32.gmra.mxu0 %v261
    %v298 = vpop.f32.mrf.mxu0
    %v299 = vadd.f32 0.0, %v298
    %300 = vdwg.mxu0
    %v301 = vadd.f32 %v264, %v299
    %v302 = vtanh.pop %v301
    %303 = vst [vmem:[%s263] sm:$0xff] %v302
    %s304 = scalar_lea.vmem [#allocation2], 24
    %v305 = vld [vmem:[%s304] sm:$0xff]
    %v306 = vld [vmem:[#allocation9] sm:$0xff]
    %v307 = vld [vmem:[#allocation9 + $0x8] sm:$0xff]
    %v308 = vld [vmem:[#allocation9 + $0x10] sm:$0xff]
    %v309 = vld [vmem:[#allocation9 + $0x18] sm:$0xff]
    %v310 = vld [vmem:[#allocation9 + $0x20] sm:$0xff]
    %v311 = vld [vmem:[#allocation9 + $0x28] sm:$0xff]
    %v312 = vld [vmem:[#allocation9 + $0x30] sm:$0xff]
    %v313 = vld [vmem:[#allocation9 + $0x38] sm:$0xff]
    %v314 = vld [vmem:[#allocation9 + $0x40] sm:$0xff]
    %v315 = vld [vmem:[#allocation9 + $0x48] sm:$0xff]
    %v316 = vld [vmem:[#allocation9 + $0x50] sm:$0xff]
    %v317 = vld [vmem:[#allocation9 + $0x58] sm:$0xff]
    %v318 = vld [vmem:[#allocation9 + $0x60] sm:$0xff]
    %v319 = vld [vmem:[#allocation9 + $0x68] sm:$0xff]
    %v320 = vld [vmem:[#allocation9 + $0x70] sm:$0xff]
    %v321 = vld [vmem:[#allocation9 + $0x78] sm:$0xff]
    %322 = vmatpush.msra.mxu0 %v321
    %323 = vmatpush.msra.mxu0 %v320
    %324 = vmatpush.msra.mxu0 %v319
    %325 = vmatpush.msra.mxu0 %v318
    %326 = vmatpush.msra.mxu0 %v317
    %327 = vmatpush.msra.mxu0 %v316
    %328 = vmatpush.msra.mxu0 %v315
    %329 = vmatpush.msra.mxu0 %v314
    %330 = vmatpush.msra.mxu0 %v313
    %331 = vmatpush.msra.mxu0 %v312
    %332 = vmatpush.msra.mxu0 %v311
    %333 = vmatpush.msra.mxu0 %v310
    %334 = vmatpush.msra.mxu0 %v309
    %335 = vmatpush.msra.mxu0 %v308
    %336 = vmatpush.msra.mxu0 %v307
    %337 = vmatpush.msra.mxu0 %v306
    %338 = vmatmul.f32.gmra.mxu0 %v302
    %v339 = vpop.f32.mrf.mxu0
    %v340 = vadd.f32 0.0, %v339
    %341 = vdwg.mxu0
    %v342 = vadd.f32 %v305, %v340
    %v343 = vtanh.pop %v342
    %344 = vst [vmem:[%s304] sm:$0xff] %v343
    %s345 = scalar_lea.vmem [#allocation2], 32
    %v346 = vld [vmem:[%s345] sm:$0xff]
    %v347 = vld [vmem:[#allocation9] sm:$0xff]
    %v348 = vld [vmem:[#allocation9 + $0x8] sm:$0xff]
    %v349 = vld [vmem:[#allocation9 + $0x10] sm:$0xff]
    %v350 = vld [vmem:[#allocation9 + $0x18] sm:$0xff]
    %v351 = vld [vmem:[#allocation9 + $0x20] sm:$0xff]
    %v352 = vld [vmem:[#allocation9 + $0x28] sm:$0xff]
    %v353 = vld [vmem:[#allocation9 + $0x30] sm:$0xff]
    %v354 = vld [vmem:[#allocation9 + $0x38] sm:$0xff]
    %v355 = vld [vmem:[#allocation9 + $0x40] sm:$0xff]
    %v356 = vld [vmem:[#allocation9 + $0x48] sm:$0xff]
    %v357 = vld [vmem:[#allocation9 + $0x50] sm:$0xff]
    %v358 = vld [vmem:[#allocation9 + $0x58] sm:$0xff]
    %v359 = vld [vmem:[#allocation9 + $0x60] sm:$0xff]
    %v360 = vld [vmem:[#allocation9 + $0x68] sm:$0xff]
    %v361 = vld [vmem:[#allocation9 + $0x70] sm:$0xff]
    %v362 = vld [vmem:[#allocation9 + $0x78] sm:$0xff]
    %363 = vmatpush.msra.mxu0 %v362
    %364 = vmatpush.msra.mxu0 %v361
    %365 = vmatpush.msra.mxu0 %v360
    %366 = vmatpush.msra.mxu0 %v359
    %367 = vmatpush.msra.mxu0 %v358
    %368 = vmatpush.msra.mxu0 %v357
    %369 = vmatpush.msra.mxu0 %v356
    %370 = vmatpush.msra.mxu0 %v355
    %371 = vmatpush.msra.mxu0 %v354
    %372 = vmatpush.msra.mxu0 %v353
    %373 = vmatpush.msra.mxu0 %v352
    %374 = vmatpush.msra.mxu0 %v351
    %375 = vmatpush.msra.mxu0 %v350
    %376 = vmatpush.msra.mxu0 %v349
    %377 = vmatpush.msra.mxu0 %v348
    %378 = vmatpush.msra.mxu0 %v347
    %379 = vmatmul.f32.gmra.mxu0 %v343
    %v380 = vpop.f32.mrf.mxu0
    %v381 = vadd.f32 0.0, %v380
    %382 = vdwg.mxu0
    %v383 = vadd.f32 %v346, %v381
    %v384 = vtanh.pop %v383
    %385 = vst [vmem:[%s345] sm:$0xff] %v384
    %s386 = scalar_lea.vmem [#allocation2], 40
    %v387 = vld [vmem:[%s386] sm:$0xff]
    %v388 = vld [vmem:[#allocation9] sm:$0xff]
    %v389 = vld [vmem:[#allocation9 + $0x8] sm:$0xff]
    %v390 = vld [vmem:[#allocation9 + $0x10] sm:$0xff]
    %v391 = vld [vmem:[#allocation9 + $0x18] sm:$0xff]
    %v392 = vld [vmem:[#allocation9 + $0x20] sm:$0xff]
    %v393 = vld [vmem:[#allocation9 + $0x28] sm:$0xff]
    %v394 = vld [vmem:[#allocation9 + $0x30] sm:$0xff]
    %v395 = vld [vmem:[#allocation9 + $0x38] sm:$0xff]
    %v396 = vld [vmem:[#allocation9 + $0x40] sm:$0xff]
    %v397 = vld [vmem:[#allocation9 + $0x48] sm:$0xff]
    %v398 = vld [vmem:[#allocation9 + $0x50] sm:$0xff]
    %v399 = vld [vmem:[#allocation9 + $0x58] sm:$0xff]
    %v400 = vld [vmem:[#allocation9 + $0x60] sm:$0xff]
    %v401 = vld [vmem:[#allocation9 + $0x68] sm:$0xff]
    %v402 = vld [vmem:[#allocation9 + $0x70] sm:$0xff]
    %v403 = vld [vmem:[#allocation9 + $0x78] sm:$0xff]
    %404 = vmatpush.msra.mxu0 %v403
    %405 = vmatpush.msra.mxu0 %v402
    %406 = vmatpush.msra.mxu0 %v401
    %407 = vmatpush.msra.mxu0 %v400
    %408 = vmatpush.msra.mxu0 %v399
    %409 = vmatpush.msra.mxu0 %v398
    %410 = vmatpush.msra.mxu0 %v397
    %411 = vmatpush.msra.mxu0 %v396
    %412 = vmatpush.msra.mxu0 %v395
    %413 = vmatpush.msra.mxu0 %v394
    %414 = vmatpush.msra.mxu0 %v393
    %415 = vmatpush.msra.mxu0 %v392
    %416 = vmatpush.msra.mxu0 %v391
    %417 = vmatpush.msra.mxu0 %v390
    %418 = vmatpush.msra.mxu0 %v389
    %419 = vmatpush.msra.mxu0 %v388
    %420 = vmatmul.f32.gmra.mxu0 %v384
    %v421 = vpop.f32.mrf.mxu0
    %v422 = vadd.f32 0.0, %v421
    %423 = vdwg.mxu0
    %v424 = vadd.f32 %v387, %v422
    %v425 = vtanh.pop %v424
    %426 = vst [vmem:[%s386] sm:$0xff] %v425
    %s427 = scalar_lea.vmem [#allocation2], 48
    %v428 = vld [vmem:[%s427] sm:$0xff]
    %v429 = vld [vmem:[#allocation9] sm:$0xff]
    %v430 = vld [vmem:[#allocation9 + $0x8] sm:$0xff]
    %v431 = vld [vmem:[#allocation9 + $0x10] sm:$0xff]
    %v432 = vld [vmem:[#allocation9 + $0x18] sm:$0xff]
    %v433 = vld [vmem:[#allocation9 + $0x20] sm:$0xff]
    %v434 = vld [vmem:[#allocation9 + $0x28] sm:$0xff]
    %v435 = vld [vmem:[#allocation9 + $0x30] sm:$0xff]
    %v436 = vld [vmem:[#allocation9 + $0x38] sm:$0xff]
    %v437 = vld [vmem:[#allocation9 + $0x40] sm:$0xff]
    %v438 = vld [vmem:[#allocation9 + $0x48] sm:$0xff]
    %v439 = vld [vmem:[#allocation9 + $0x50] sm:$0xff]
    %v440 = vld [vmem:[#allocation9 + $0x58] sm:$0xff]
    %v441 = vld [vmem:[#allocation9 + $0x60] sm:$0xff]
    %v442 = vld [vmem:[#allocation9 + $0x68] sm:$0xff]
    %v443 = vld [vmem:[#allocation9 + $0x70] sm:$0xff]
    %v444 = vld [vmem:[#allocation9 + $0x78] sm:$0xff]
    %445 = vmatpush.msra.mxu0 %v444
    %446 = vmatpush.msra.mxu0 %v443
    %447 = vmatpush.msra.mxu0 %v442
    %448 = vmatpush.msra.mxu0 %v441
    %449 = vmatpush.msra.mxu0 %v440
    %450 = vmatpush.msra.mxu0 %v439
    %451 = vmatpush.msra.mxu0 %v438
    %452 = vmatpush.msra.mxu0 %v437
    %453 = vmatpush.msra.mxu0 %v436
    %454 = vmatpush.msra.mxu0 %v435
    %455 = vmatpush.msra.mxu0 %v434
    %456 = vmatpush.msra.mxu0 %v433
    %457 = vmatpush.msra.mxu0 %v432
    %458 = vmatpush.msra.mxu0 %v431
    %459 = vmatpush.msra.mxu0 %v430
    %460 = vmatpush.msra.mxu0 %v429
    %461 = vmatmul.f32.gmra.mxu0 %v425
    %v462 = vpop.f32.mrf.mxu0
    %v463 = vadd.f32 0.0, %v462
    %464 = vdwg.mxu0
    %v465 = vadd.f32 %v428, %v463
    %v466 = vtanh.pop %v465
    %467 = vst [vmem:[%s427] sm:$0xff] %v466
    %s468 = scalar_lea.vmem [#allocation2], 56
    %v469 = vld [vmem:[%s468] sm:$0xff]
    %v470 = vld [vmem:[#allocation9] sm:$0xff]
    %v471 = vld [vmem:[#allocation9 + $0x8] sm:$0xff]
    %v472 = vld [vmem:[#allocation9 + $0x10] sm:$0xff]
    %v473 = vld [vmem:[#allocation9 + $0x18] sm:$0xff]
    %v474 = vld [vmem:[#allocation9 + $0x20] sm:$0xff]
    %v475 = vld [vmem:[#allocation9 + $0x28] sm:$0xff]
    %v476 = vld [vmem:[#allocation9 + $0x30] sm:$0xff]
    %v477 = vld [vmem:[#allocation9 + $0x38] sm:$0xff]
    %v478 = vld [vmem:[#allocation9 + $0x40] sm:$0xff]
    %v479 = vld [vmem:[#allocation9 + $0x48] sm:$0xff]
    %v480 = vld [vmem:[#allocation9 + $0x50] sm:$0xff]
    %v481 = vld [vmem:[#allocation9 + $0x58] sm:$0xff]
    %v482 = vld [vmem:[#allocation9 + $0x60] sm:$0xff]
    %v483 = vld [vmem:[#allocation9 + $0x68] sm:$0xff]
    %v484 = vld [vmem:[#allocation9 + $0x70] sm:$0xff]
    %v485 = vld [vmem:[#allocation9 + $0x78] sm:$0xff]
    %486 = vmatpush.msra.mxu0 %v485
    %487 = vmatpush.msra.mxu0 %v484
    %488 = vmatpush.msra.mxu0 %v483
    %489 = vmatpush.msra.mxu0 %v482
    %490 = vmatpush.msra.mxu0 %v481
    %491 = vmatpush.msra.mxu0 %v480
    %492 = vmatpush.msra.mxu0 %v479
    %493 = vmatpush.msra.mxu0 %v478
    %494 = vmatpush.msra.mxu0 %v477
    %495 = vmatpush.msra.mxu0 %v476
    %496 = vmatpush.msra.mxu0 %v475
    %497 = vmatpush.msra.mxu0 %v474
    %498 = vmatpush.msra.mxu0 %v473
    %499 = vmatpush.msra.mxu0 %v472
    %500 = vmatpush.msra.mxu0 %v471
    %501 = vmatpush.msra.mxu0 %v470
    %502 = vmatmul.f32.gmra.mxu0 %v466
    %v503 = vpop.f32.mrf.mxu0
    %v504 = vadd.f32 0.0, %v503
    %505 = vdwg.mxu0
    %v506 = vadd.f32 %v469, %v504
    %v507 = vtanh.pop %v506
    %508 = vst [vmem:[%s468] sm:$0xff] %v507
    %v509 = vld [vmem:[#allocation2] sm:$0xff]
    %v510 = vld [vmem:[#allocation2 + $0x8] sm:$0xff]
    %v511 = vld [vmem:[#allocation2 + $0x10] sm:$0xff]
    %v512 = vld [vmem:[#allocation2 + $0x18] sm:$0xff]
    %v513 = vld [vmem:[#allocation2 + $0x20] sm:$0xff]
    %v514 = vld [vmem:[#allocation2 + $0x28] sm:$0xff]
    %v515 = vld [vmem:[#allocation2 + $0x30] sm:$0xff]
    %v516 = vld [vmem:[#allocation2 + $0x38] sm:$0xff]
    %v517 = vld [vmem:[#allocation8] sm:$0xff]
    %v518 = vld [vmem:[#allocation8 + $0x8] sm:$0xff]
    %v519 = vld [vmem:[#allocation8 + $0x10] sm:$0xff]
    %v520 = vld [vmem:[#allocation8 + $0x18] sm:$0xff]
    %v521 = vld [vmem:[#allocation8 + $0x20] sm:$0xff]
    %v522 = vld [vmem:[#allocation8 + $0x28] sm:$0xff]
    %v523 = vld [vmem:[#allocation8 + $0x30] sm:$0xff]
    %v524 = vld [vmem:[#allocation8 + $0x38] sm:$0xff]
    %v525 = vld [vmem:[#allocation8 + $0x40] sm:$0xff]
    %v526 = vld [vmem:[#allocation8 + $0x48] sm:$0xff]
    %v527 = vld [vmem:[#allocation8 + $0x50] sm:$0xff]
    %v528 = vld [vmem:[#allocation8 + $0x58] sm:$0xff]
    %v529 = vld [vmem:[#allocation8 + $0x60] sm:$0xff]
    %v530 = vld [vmem:[#allocation8 + $0x68] sm:$0xff]
    %v531 = vld [vmem:[#allocation8 + $0x70] sm:$0xff]
    %v532 = vld [vmem:[#allocation8 + $0x78] sm:$0xff]
    %s533 = scalar_lea.vmem %s4, 1
    %v534 = vld [vmem:[%s533] sm:$0x1]
    %v536 = vperm.slane %v534, 0
    %538 = vmatpush.msra.mxu0 %v532
    %539 = vmatpush.msra.mxu0 %v531
    %540 = vmatpush.msra.mxu0 %v530
    %541 = vmatpush.msra.mxu0 %v529
    %542 = vmatpush.msra.mxu0 %v528
    %543 = vmatpush.msra.mxu0 %v527
    %544 = vmatpush.msra.mxu0 %v526
    %545 = vmatpush.msra.mxu0 %v525
    %546 = vmatpush.msra.mxu0 %v524
    %547 = vmatpush.msra.mxu0 %v523
    %548 = vmatpush.msra.mxu0 %v522
    %549 = vmatpush.msra.mxu0 %v521
    %550 = vmatpush.msra.mxu0 %v520
    %551 = vmatpush.msra.mxu0 %v519
    %552 = vmatpush.msra.mxu0 %v518
    %553 = vmatpush.msra.mxu0 %v517
    %554 = vmatmul.f32.gmra.mxu0 %v509
    %v555 = vpop.f32.mrf.mxu0
    %v556 = vadd.f32 %v536, %v555
    %557 = vmatmul.f32.gmra.mxu0 %v510
    %v558 = vpop.f32.mrf.mxu0
    %v559 = vadd.f32 %v536, %v558
    %560 = vmatmul.f32.gmra.mxu0 %v511
    %v561 = vpop.f32.mrf.mxu0
    %v562 = vadd.f32 %v536, %v561
    %563 = vmatmul.f32.gmra.mxu0 %v512
    %v564 = vpop.f32.mrf.mxu0
    %v565 = vadd.f32 %v536, %v564
    %566 = vmatmul.f32.gmra.mxu0 %v513
    %v567 = vpop.f32.mrf.mxu0
    %v568 = vadd.f32 %v536, %v567
    %569 = vmatmul.f32.gmra.mxu0 %v514
    %v570 = vpop.f32.mrf.mxu0
    %v571 = vadd.f32 %v536, %v570
    %572 = vmatmul.f32.gmra.mxu0 %v515
    %v573 = vpop.f32.mrf.mxu0
    %v574 = vadd.f32 %v536, %v573
    %575 = vmatmul.f32.gmra.mxu0 %v516
    %v576 = vpop.f32.mrf.mxu0
    %v577 = vadd.f32 %v536, %v576
    %578 = vdwg.mxu0
    %579 = vst [vmem:[#allocation2] sm:$0xff] %v556
    %580 = vst [vmem:[#allocation2 + $0x8] sm:$0xff] %v559
    %581 = vst [vmem:[#allocation2 + $0x10] sm:$0xff] %v562
    %582 = vst [vmem:[#allocation2 + $0x18] sm:$0xff] %v565
    %583 = vst [vmem:[#allocation2 + $0x20] sm:$0xff] %v568
    %584 = vst [vmem:[#allocation2 + $0x28] sm:$0xff] %v571
    %585 = vst [vmem:[#allocation2 + $0x30] sm:$0xff] %v574
    %586 = vst [vmem:[#allocation2 + $0x38] sm:$0xff] %v577
    %v587 = vld [vmem:[#allocation2] sm:$0xff]
    %s588 = scalar_lea.vmem [#allocation9], 128
    %v589 = vld [vmem:[%s588] sm:$0xff]
    %v590 = vld [vmem:[%s588 + $0x8] sm:$0xff]
    %v591 = vld [vmem:[%s588 + $0x10] sm:$0xff]
    %v592 = vld [vmem:[%s588 + $0x18] sm:$0xff]
    %v593 = vld [vmem:[%s588 + $0x20] sm:$0xff]
    %v594 = vld [vmem:[%s588 + $0x28] sm:$0xff]
    %v595 = vld [vmem:[%s588 + $0x30] sm:$0xff]
    %v596 = vld [vmem:[%s588 + $0x38] sm:$0xff]
    %v597 = vld [vmem:[%s588 + $0x40] sm:$0xff]
    %v598 = vld [vmem:[%s588 + $0x48] sm:$0xff]
    %v599 = vld [vmem:[%s588 + $0x50] sm:$0xff]
    %v600 = vld [vmem:[%s588 + $0x58] sm:$0xff]
    %v601 = vld [vmem:[%s588 + $0x60] sm:$0xff]
    %v602 = vld [vmem:[%s588 + $0x68] sm:$0xff]
    %v603 = vld [vmem:[%s588 + $0x70] sm:$0xff]
    %v604 = vld [vmem:[%s588 + $0x78] sm:$0xff]
    %605 = vmatpush.msra.mxu0 %v604
    %606 = vmatpush.msra.mxu0 %v603
    %607 = vmatpush.msra.mxu0 %v602
    %608 = vmatpush.msra.mxu0 %v601
    %609 = vmatpush.msra.mxu0 %v600
    %610 = vmatpush.msra.mxu0 %v599
    %611 = vmatpush.msra.mxu0 %v598
    %612 = vmatpush.msra.mxu0 %v597
    %613 = vmatpush.msra.mxu0 %v596
    %614 = vmatpush.msra.mxu0 %v595
    %615 = vmatpush.msra.mxu0 %v594
    %616 = vmatpush.msra.mxu0 %v593
    %617 = vmatpush.msra.mxu0 %v592
    %618 = vmatpush.msra.mxu0 %v591
    %619 = vmatpush.msra.mxu0 %v590
    %620 = vmatpush.msra.mxu0 %v589
    %621 = vmatmul.f32.gmra.mxu0 0.0
    %v622 = vpop.f32.mrf.mxu0
    %v623 = vadd.f32 0.0, %v622
    %624 = vdwg.mxu0
    %v625 = vadd.f32 %v587, %v623
    %v626 = vtanh.pop %v625
    %v627 = vld [vmem:[%s222] sm:$0xff]
    %628 = vmatpush.msra.mxu0 %v604
    %629 = vmatpush.msra.mxu0 %v603
    %630 = vmatpush.msra.mxu0 %v602
    %631 = vmatpush.msra.mxu0 %v601
    %632 = vmatpush.msra.mxu0 %v600
    %633 = vmatpush.msra.mxu0 %v599
    %634 = vmatpush.msra.mxu0 %v598
    %635 = vmatpush.msra.mxu0 %v597
    %636 = vmatpush.msra.mxu0 %v596
    %637 = vmatpush.msra.mxu0 %v595
    %638 = vmatpush.msra.mxu0 %v594
    %639 = vmatpush.msra.mxu0 %v593
    %640 = vmatpush.msra.mxu0 %v592
    %641 = vmatpush.msra.mxu0 %v591
    %642 = vmatpush.msra.mxu0 %v590
    %643 = vmatpush.msra.mxu0 %v589
    %644 = vmatmul.f32.gmra.mxu0 %v626
    %v645 = vpop.f32.mrf.mxu0
    %v646 = vadd.f32 0.0, %v645
    %647 = vdwg.mxu0
    %v648 = vadd.f32 %v627, %v646
    %v649 = vtanh.pop %v648
    %v650 = vld [vmem:[%s263] sm:$0xff]
    %651 = vmatpush.msra.mxu0 %v604
    %652 = vmatpush.msra.mxu0 %v603
    %653 = vmatpush.msra.mxu0 %v602
    %654 = vmatpush.msra.mxu0 %v601
    %655 = vmatpush.msra.mxu0 %v600
    %656 = vmatpush.msra.mxu0 %v599
    %657 = vmatpush.msra.mxu0 %v598
    %658 = vmatpush.msra.mxu0 %v597
    %659 = vmatpush.msra.mxu0 %v596
    %660 = vmatpush.msra.mxu0 %v595
    %661 = vmatpush.msra.mxu0 %v594
    %662 = vmatpush.msra.mxu0 %v593
    %663 = vmatpush.msra.mxu0 %v592
    %664 = vmatpush.msra.mxu0 %v591
    %665 = vmatpush.msra.mxu0 %v590
    %666 = vmatpush.msra.mxu0 %v589
    %667 = vmatmul.f32.gmra.mxu0 %v649
    %v668 = vpop.f32.mrf.mxu0
    %v669 = vadd.f32 0.0, %v668
    %670 = vdwg.mxu0
    %v671 = vadd.f32 %v650, %v669
    %v672 = vtanh.pop %v671
    %v673 = vld [vmem:[%s304] sm:$0xff]
    %674 = vmatpush.msra.mxu0 %v604
    %675 = vmatpush.msra.mxu0 %v603
    %676 = vmatpush.msra.mxu0 %v602
    %677 = vmatpush.msra.mxu0 %v601
    %678 = vmatpush.msra.mxu0 %v600
    %679 = vmatpush.msra.mxu0 %v599
    %680 = vmatpush.msra.mxu0 %v598
    %681 = vmatpush.msra.mxu0 %v597
    %682 = vmatpush.msra.mxu0 %v596
    %683 = vmatpush.msra.mxu0 %v595
    %684 = vmatpush.msra.mxu0 %v594
    %685 = vmatpush.msra.mxu0 %v593
    %686 = vmatpush.msra.mxu0 %v592
    %687 = vmatpush.msra.mxu0 %v591
    %688 = vmatpush.msra.mxu0 %v590
    %689 = vmatpush.msra.mxu0 %v589
    %690 = vmatmul.f32.gmra.mxu0 %v672
    %v691 = vpop.f32.mrf.mxu0
    %v692 = vadd.f32 0.0, %v691
    %693 = vdwg.mxu0
    %v694 = vadd.f32 %v673, %v692
    %v695 = vtanh.pop %v694
    %v696 = vld [vmem:[%s345] sm:$0xff]
    %697 = vmatpush.msra.mxu0 %v604
    %698 = vmatpush.msra.mxu0 %v603
    %699 = vmatpush.msra.mxu0 %v602
    %700 = vmatpush.msra.mxu0 %v601
    %701 = vmatpush.msra.mxu0 %v600
    %702 = vmatpush.msra.mxu0 %v599
    %703 = vmatpush.msra.mxu0 %v598
    %704 = vmatpush.msra.mxu0 %v597
    %705 = vmatpush.msra.mxu0 %v596
    %706 = vmatpush.msra.mxu0 %v595
    %707 = vmatpush.msra.mxu0 %v594
    %708 = vmatpush.msra.mxu0 %v593
    %709 = vmatpush.msra.mxu0 %v592
    %710 = vmatpush.msra.mxu0 %v591
    %711 = vmatpush.msra.mxu0 %v590
    %712 = vmatpush.msra.mxu0 %v589
    %713 = vmatmul.f32.gmra.mxu0 %v695
    %v714 = vpop.f32.mrf.mxu0
    %v715 = vadd.f32 0.0, %v714
    %716 = vdwg.mxu0
    %v717 = vadd.f32 %v696, %v715
    %v718 = vtanh.pop %v717
    %v719 = vld [vmem:[%s386] sm:$0xff]
    %720 = vmatpush.msra.mxu0 %v604
    %721 = vmatpush.msra.mxu0 %v603
    %722 = vmatpush.msra.mxu0 %v602
    %723 = vmatpush.msra.mxu0 %v601
    %724 = vmatpush.msra.mxu0 %v600
    %725 = vmatpush.msra.mxu0 %v599
    %726 = vmatpush.msra.mxu0 %v598
    %727 = vmatpush.msra.mxu0 %v597
    %728 = vmatpush.msra.mxu0 %v596
    %729 = vmatpush.msra.mxu0 %v595
    %730 = vmatpush.msra.mxu0 %v594
    %731 = vmatpush.msra.mxu0 %v593
    %732 = vmatpush.msra.mxu0 %v592
    %733 = vmatpush.msra.mxu0 %v591
    %734 = vmatpush.msra.mxu0 %v590
    %735 = vmatpush.msra.mxu0 %v589
    %736 = vmatmul.f32.gmra.mxu0 %v718
    %v737 = vpop.f32.mrf.mxu0
    %v738 = vadd.f32 0.0, %v737
    %739 = vdwg.mxu0
    %v740 = vadd.f32 %v719, %v738
    %v741 = vtanh.pop %v740
    %v742 = vld [vmem:[%s427] sm:$0xff]
    %743 = vmatpush.msra.mxu0 %v604
    %744 = vmatpush.msra.mxu0 %v603
    %745 = vmatpush.msra.mxu0 %v602
    %746 = vmatpush.msra.mxu0 %v601
    %747 = vmatpush.msra.mxu0 %v600
    %748 = vmatpush.msra.mxu0 %v599
    %749 = vmatpush.msra.mxu0 %v598
    %750 = vmatpush.msra.mxu0 %v597
    %751 = vmatpush.msra.mxu0 %v596
    %752 = vmatpush.msra.mxu0 %v595
    %753 = vmatpush.msra.mxu0 %v594
    %754 = vmatpush.msra.mxu0 %v593
    %755 = vmatpush.msra.mxu0 %v592
    %756 = vmatpush.msra.mxu0 %v591
    %757 = vmatpush.msra.mxu0 %v590
    %758 = vmatpush.msra.mxu0 %v589
    %759 = vmatmul.f32.gmra.mxu0 %v741
    %v760 = vpop.f32.mrf.mxu0
    %v761 = vadd.f32 0.0, %v760
    %762 = vdwg.mxu0
    %v763 = vadd.f32 %v742, %v761
    %v764 = vtanh.pop %v763
    %v765 = vld [vmem:[%s468] sm:$0xff]
    %766 = vmatpush.msra.mxu0 %v604
    %767 = vmatpush.msra.mxu0 %v603
    %768 = vmatpush.msra.mxu0 %v602
    %769 = vmatpush.msra.mxu0 %v601
    %770 = vmatpush.msra.mxu0 %v600
    %771 = vmatpush.msra.mxu0 %v599
    %772 = vmatpush.msra.mxu0 %v598
    %773 = vmatpush.msra.mxu0 %v597
    %774 = vmatpush.msra.mxu0 %v596
    %775 = vmatpush.msra.mxu0 %v595
    %776 = vmatpush.msra.mxu0 %v594
    %777 = vmatpush.msra.mxu0 %v593
    %778 = vmatpush.msra.mxu0 %v592
    %779 = vmatpush.msra.mxu0 %v591
    %780 = vmatpush.msra.mxu0 %v590
    %781 = vmatpush.msra.mxu0 %v589
    %782 = vmatmul.f32.gmra.mxu0 %v764
    %v783 = vpop.f32.mrf.mxu0
    %v784 = vadd.f32 0.0, %v783
    %785 = vdwg.mxu0
    %v786 = vadd.f32 %v765, %v784
    %v787 = vtanh.pop %v786
    %v788 = vld [vmem:[#allocation11] sm:$0xff]
    %v789 = vld [vmem:[#allocation11 + $0x8] sm:$0xff]
    %v790 = vld [vmem:[#allocation11 + $0x10] sm:$0xff]
    %v791 = vld [vmem:[#allocation11 + $0x18] sm:$0xff]
    %v792 = vld [vmem:[#allocation11 + $0x20] sm:$0xff]
    %v793 = vld [vmem:[#allocation11 + $0x28] sm:$0xff]
    %v794 = vld [vmem:[#allocation11 + $0x30] sm:$0xff]
    %v795 = vld [vmem:[#allocation11 + $0x38] sm:$0xff]
    %v796 = vld [vmem:[#allocation11 + $0x40] sm:$0xff]
    %v797 = vld [vmem:[#allocation11 + $0x48] sm:$0xff]
    %v798 = vld [vmem:[#allocation11 + $0x50] sm:$0xff]
    %v799 = vld [vmem:[#allocation11 + $0x58] sm:$0xff]
    %v800 = vld [vmem:[#allocation11 + $0x60] sm:$0xff]
    %v801 = vld [vmem:[#allocation11 + $0x68] sm:$0xff]
    %v802 = vld [vmem:[#allocation11 + $0x70] sm:$0xff]
    %v803 = vld [vmem:[#allocation11 + $0x78] sm:$0xff]
    %v804 = vld [vmem:[%s6] sm:$0x1]
    %v806 = vperm.slane %v804, 0
    %808 = vmatpush.msra.mxu0 %v803
    %809 = vmatpush.msra.mxu0 %v802
    %810 = vmatpush.msra.mxu0 %v801
    %811 = vmatpush.msra.mxu0 %v800
    %812 = vmatpush.msra.mxu0 %v799
    %813 = vmatpush.msra.mxu0 %v798
    %814 = vmatpush.msra.mxu0 %v797
    %815 = vmatpush.msra.mxu0 %v796
    %816 = vmatpush.msra.mxu0 %v795
    %817 = vmatpush.msra.mxu0 %v794
    %818 = vmatpush.msra.mxu0 %v793
    %819 = vmatpush.msra.mxu0 %v792
    %820 = vmatpush.msra.mxu0 %v791
    %821 = vmatpush.msra.mxu0 %v790
    %822 = vmatpush.msra.mxu0 %v789
    %823 = vmatpush.msra.mxu0 %v788
    %824 = vmatmul.f32.gmra.mxu0 %v787
    %v825 = vpop.f32.mrf.mxu0
    %v826 = vadd.f32 %v806, %v825
    %827 = vdwg.mxu0
    %828 = vst [vmem:[#allocation12] sm:$0xff] %v826
    // Predicated region
    $region50: #{tpu_custom_call.1} parent=1 // pred_check
      _
    $region51: #{tpu_custom_call.1} parent=1 // pred_check_branch
      %830 = sbr.rel (0) target = $region53
    $region52: #{tpu_custom_call.1} parent=1 // pred_region
      %832 = vsyncadd [#allocation5], 0
      %s834 = sshll.u32 [#allocation12], 4
      %s835 = int_to_ptr.vmem [resolvable:$true] %s834
      %s836 = sshll.u32 %s7, 4
      %s837 = int_to_ptr.hbm [resolvable:$true] %s836
      %839 = dma.vmem_to_hbm [thread:$0]  %s835, 128, %s837, [#allocation5]
    $region53: #{tpu_custom_call.1} parent=1 // pred_fallthru
      _
    // Predicated region
    $region54: #{tpu_custom_call.1} parent=1 // pred_check
      _
    $region55: #{tpu_custom_call.1} parent=1 // pred_check_branch
      %841 = sbr.rel (0) target = $region57
    $region56: #{tpu_custom_call.1} parent=1 // pred_region
      %843 = dma.done [#allocation5], 128
    $region57: #{tpu_custom_call.1} parent=1 // pred_fallthru
      _
    %844 = vsyncpa [#allocation4], 1
    %845 = vsyncpa [#allocation7], 1
    %846 = vsyncpa [#allocation10], 1
    %847 = vsyncpa [#allocation5], 1

</llo_original>
